<compile_context>
chip_gen: v7x
topology: tpu7x:2x2x1
jax: 0.10.0
libtpu: 0.0.40
codegen_flags: <defaults>
</compile_context>

<pallas_src>
import functools

import jax
import jax.numpy as jnp
from jax import lax
from jax.experimental import pallas as pl
from jax.experimental.pallas import tpu as pltpu

CONV3D_IN = (2, 8)
CONV3D_OUT = (8, 16)
CONV3D_K = (3, 3)
POOL_K = (2, 2)          # MaxPool3d kernel (= stride), return_indices=True
DROPOUT_P = 0.2          # identity at inference (PyTorch eval semantics)

LANE = 128               # lane granularity over the flattened pooled-position axis


# ----------------------------------------------------------------------------
# Pallas kernel: fused Conv3d (single expanded matmul) + bias + 2x2x2 MaxPool
#                + argmax over the pool window
# ----------------------------------------------------------------------------
def _fused_conv_bias_pool_kernel(slab_ref, w_ref, base_ref, val_ref, idx_ref,
                                 *, cout, hc, wc, nw):
    """One grid step over a lane tile of pooled positions.

    slab_ref: (Rp, T)        deduped-offset slab (+ ones bias row), bf16
    w_ref:    (nw*cout, Rp)  expanded conv weights (+ bias column), bf16
    base_ref: (1, T)         flat (Dc*Hc*Wc) base index of each pooled position
    val_ref:  (cout, T)      pooled values   (lane-dense store)
    idx_ref:  (cout, T)      argmax flat indices (PyTorch MaxPool3d convention)
    """
    # Single MXU matmul: rows [widx*cout:(widx+1)*cout] hold the conv output
    # (incl. bias) at pool-window element widx for every pooled position.
    y = jnp.dot(w_ref[...], slab_ref[...], preferred_element_type=jnp.float32)

    t = val_ref.shape[-1]
    base = jnp.broadcast_to(base_ref[...], (cout, t))   # hoisted: broadcast once

    # Statically unrolled max/argmax over the 8 window elements in PyTorch
    # raster order (bd, bh, bw).  Strict ">" => first maximum wins (PyTorch
    # tie-break).  All compares/selects are full-width (cout, T) vreg ops; the
    # y-block slices are sublane-aligned (cout is a multiple of 8).
    best_v = y[:cout, :]
    best_i = base                                        # widx 0 offset == 0
    for widx in range(1, nw):
        bd, bh, bw = (widx >> 2) & 1, (widx >> 1) & 1, widx & 1
        off = bd * hc * wc + bh * wc + bw                # static scalar
        yv = y[widx * cout:(widx + 1) * cout, :]
        take = yv > best_v
        best_v = jnp.where(take, yv, best_v)
        best_i = jnp.where(take, base + off, best_i)

    val_ref[...] = best_v
    idx_ref[...] = best_i


# ----------------------------------------------------------------------------
# Wrapper: deduped-offset slab + expanded weights + pallas_call
# ----------------------------------------------------------------------------
def conv3d_maxpool_fused(x, w, b):
    """Fused Conv3d (VALID, stride 1, bias) + MaxPool3d(kernel=2, stride=2,
    return_indices=True).

    x: (N, Cin, D, H, W), w: (Cout, Cin, KD, KH, KW), b: (Cout,)
    Returns (pooled_values, pooled_indices), both (N, Cout, Dc//2, Hc//2, Wc//2).
    """
    N, Cin, D, H, W = x.shape
    Cout, _, KD, KH, KW = w.shape
    PK = 2                                                # pool kernel = stride
    NW = PK * PK * PK                                      # 8 window elements
    Dc, Hc, Wc = D - KD + 1, H - KH + 1, W - KW + 1        # conv output dims
    Dp, Hp, Wp = Dc // PK, Hc // PK, Wc // PK              # pooled output dims
    OD, OH, OW = KD + PK - 1, KH + PK - 1, KW + PK - 1     # deduped offset extents
    P = N * Dp * Hp * Wp                                   # pooled positions (lanes)
    R = OD * OH * OW * Cin + 1                             # contraction (+1 bias row)
    Rp = ((R + 15) // 16) * 16                             # bf16 sublane packing

    # Lane tiling: single tile when P fits in <=256 lanes; otherwise 256-lane
    # tiles so a dual-TC chip (v7x) gets >=2 tiles of *real* work, while the
    # extra step costs only ~0.35us on single-core chips.
    Ppad0 = ((P + LANE - 1) // LANE) * LANE
    tile = Ppad0 if Ppad0 <= 2 * LANE else 2 * LANE
    Ppad = ((Ppad0 + tile - 1) // tile) * tile
    n_tiles = Ppad // tile

    x32 = x.astype(jnp.float32)

    # Deduped-offset slab: one strided slice per distinct (od, oh, ow) offset
    # (<= 64 slices; no 8x pool-window expansion, no per-tap duplication).
    slabs = []
    for od in range(OD):
        for oh in range(OH):
            for ow in range(OW):
                slabs.append(x32[:, :,
                                 od: od + PK * Dp: PK,
                                 oh: oh + PK * Hp: PK,
                                 ow: ow + PK * Wp: PK])
    slab = jnp.stack(slabs, axis=0)                        # (O3, N, Cin, Dp, Hp, Wp)
    slab = jnp.transpose(slab, (0, 2, 1, 3, 4, 5))         # (O3, Cin, N, Dp, Hp, Wp)
    slab = slab.reshape(OD * OH * OW * Cin, P)
    slab = jnp.concatenate([slab, jnp.ones((1, P), jnp.float32)], axis=0)  # bias row
    slab = jnp.pad(slab, ((0, Rp - R), (0, Ppad - P))).astype(jnp.bfloat16)

    # Expanded weights: W8[widx*Cout + co, (od,oh,ow,cin)] = w[co,cin,od-bd,oh-bh,ow-bw]
    # (zero where the tap falls outside the kernel), plus a bias column per block.
    w_t = jnp.transpose(w, (0, 2, 3, 4, 1)).astype(jnp.float32)   # (Cout,KD,KH,KW,Cin)
    b_col = b.reshape(Cout, 1).astype(jnp.float32)
    blocks = []
    for bd in range(PK):
        for bh in range(PK):
            for bw in range(PK):
                wb = jnp.pad(w_t, ((0, 0),
                                   (bd, OD - KD - bd),
                                   (bh, OH - KH - bh),
                                   (bw, OW - KW - bw),
                                   (0, 0)))
                wb = wb.reshape(Cout, OD * OH * OW * Cin)
                blocks.append(jnp.concatenate([wb, b_col], axis=1))
    w8 = jnp.concatenate(blocks, axis=0)                   # (NW*Cout, R)
    w8 = jnp.pad(w8, ((0, 0), (0, Rp - R))).astype(jnp.bfloat16)

    # Per-pooled-position flat spatial base index (window corner) — tiny (1, Ppad).
    base = ((PK * jnp.arange(Dp))[:, None, None] * (Hc * Wc)
            + (PK * jnp.arange(Hp))[None, :, None] * Wc
            + (PK * jnp.arange(Wp))[None, None, :]).reshape(1, -1).astype(jnp.int32)
    base = jnp.pad(jnp.tile(base, (1, N)), ((0, 0), (0, Ppad - P)))

    kernel = functools.partial(_fused_conv_bias_pool_kernel,
                               cout=Cout, hc=Hc, wc=Wc, nw=NW)
    val, idx = pl.pallas_call(
        kernel,
        out_shape=(jax.ShapeDtypeStruct((Cout, Ppad), jnp.float32),
                   jax.ShapeDtypeStruct((Cout, Ppad), jnp.int32)),
        grid=(n_tiles,),
        in_specs=[
            pl.BlockSpec((Rp, tile), lambda i: (0, i)),
            pl.BlockSpec((NW * Cout, Rp), lambda i: (0, 0)),
            pl.BlockSpec((1, tile), lambda i: (0, i)),
        ],
        out_specs=[
            pl.BlockSpec((Cout, tile), lambda i: (0, i)),
            pl.BlockSpec((Cout, tile), lambda i: (0, i)),
        ],
        compiler_params=pltpu.CompilerParams(
            dimension_semantics=("parallel",)),
    )(slab, w8, base)

    # Back to NCDHW for the public interface.
    val = val[:, :P].reshape(Cout, N, Dp, Hp, Wp).transpose(1, 0, 2, 3, 4)
    idx = idx[:, :P].reshape(Cout, N, Dp, Hp, Wp).transpose(1, 0, 2, 3, 4)
    return val, idx


def encoder3d_forward(x, params):
    """Mirrors Encoder3D.forward: Conv3d -> Dropout -> MaxPool3d per layer; collects pool indices."""
    idxs = []
    for (w, b) in params:
        # Dropout(p=0.2): identity at inference (PyTorch eval semantics).
        # TODO(synk): train-mode dropout RNG not reproduced.
        x, idx = conv3d_maxpool_fused(x, w, b)
        idxs.append(idx)
    return x, idxs


# ----------------------------------------------------------------------------
# Pure-JAX references (for correctness check only)
# ----------------------------------------------------------------------------
def _ref_conv3d(x, w, b):
    y = lax.conv_general_dilated(
        x, w, window_strides=(1, 1, 1), padding="VALID",
        dimension_numbers=("NCDHW", "OIDHW", "NCDHW"),
        precision=lax.Precision.HIGHEST,
    )
    return y + b.reshape(1, -1, 1, 1, 1)


def _ref_maxpool3d(y):
    N, C, D, H, W = y.shape
    Do, Ho, Wo = D // 2, H // 2, W // 2
    yc = y[:, :, : 2 * Do, : 2 * Ho, : 2 * Wo].reshape(N, C, Do, 2, Ho, 2, Wo, 2)
    yw = jnp.transpose(yc, (0, 1, 2, 4, 6, 3, 5, 7)).reshape(N, C, Do, Ho, Wo, 8)
    mv = yw.max(-1)
    am = jnp.argmax(yw, axis=-1)
    bd, bh, bw = am // 4, (am // 2) % 2, am % 2
    do_ = jnp.arange(Do).reshape(1, 1, Do, 1, 1)
    ho_ = jnp.arange(Ho).reshape(1, 1, 1, Ho, 1)
    wo_ = jnp.arange(Wo).reshape(1, 1, 1, 1, Wo)
    idx = (2 * do_ + bd) * (H * W) + (2 * ho_ + bh) * W + (2 * wo_ + bw)
    return mv, idx.astype(jnp.int32)


# ----------------------------------------------------------------------------
if __name__ == "__main__":
    key = jax.random.PRNGKey(0)
    keys = jax.random.split(key, 1 + 2 * len(CONV3D_IN))
    x = jax.random.normal(keys[0], (2, CONV3D_IN[0], 10, 18, 18), dtype=jnp.float32)

    params = []
    for layer, (cin, cout, k) in enumerate(zip(CONV3D_IN, CONV3D_OUT, CONV3D_K)):
        fan_in = cin * k * k * k
        bound = 1.0 / (fan_in ** 0.5)
        w = jax.random.uniform(keys[1 + 2 * layer], (cout, cin, k, k, k),
                               jnp.float32, -bound, bound)
        b = jax.random.uniform(keys[2 + 2 * layer], (cout,), jnp.float32, -bound, bound)
        params.append((w, b))

    fwd = jax.jit(encoder3d_forward)
    out, idxs = fwd(x, params)
    jax.block_until_ready(out)
    for i in idxs:
        jax.block_until_ready(i)

    # Layer-by-layer correctness check against plain-JAX f32 references.
    # Tolerances account for bf16-streamed operands (f32 accumulation in-kernel).
    TOL = 1e-2
    cur = x
    for (w, b) in params:
        y_ref = _ref_conv3d(cur, w, b)
        mv_ref, _ = _ref_maxpool3d(y_ref)
        mv_pl, mi_pl = conv3d_maxpool_fused(cur, w, b)
        assert mv_pl.shape == mv_ref.shape
        assert jnp.allclose(mv_pl, mv_ref, atol=TOL, rtol=TOL), "pooled value mismatch"

        # Index semantics check (robust to numerically near-tied windows):
        # the returned flat index must lie inside its own 2x2x2 window and point
        # at a conv value equal to the returned max (within bf16 tolerance).
        N_, C_, Dc, Hc, Wc = y_ref.shape
        Dp, Hp, Wp = Dc // 2, Hc // 2, Wc // 2
        d_i = mi_pl // (Hc * Wc)
        h_i = (mi_pl // Wc) % Hc
        w_i = mi_pl % Wc
        dp_ = jnp.arange(Dp).reshape(1, 1, Dp, 1, 1)
        hp_ = jnp.arange(Hp).reshape(1, 1, 1, Hp, 1)
        wp_ = jnp.arange(Wp).reshape(1, 1, 1, 1, Wp)
        in_window = (d_i // 2 == dp_) & (h_i // 2 == hp_) & (w_i // 2 == wp_)
        assert bool(jnp.all(in_window)), "pool index outside its window"
        gathered = jnp.take_along_axis(
            y_ref.reshape(N_, C_, -1), mi_pl.reshape(N_, C_, -1), axis=2
        ).reshape(mv_pl.shape)
        assert jnp.allclose(gathered, mv_pl, atol=TOL, rtol=TOL), "pool index/value mismatch"

        cur = mv_pl

    assert out.shape == (2, CONV3D_OUT[-1], 1, 3, 3)
    assert jnp.allclose(out, cur, atol=1e-5, rtol=1e-5)
    print("KERNEL_OK")
</pallas_src>

<mosaic_0001>
module attributes {stable_mosaic.version = 11 : i64} {
  func.func @_fused_conv_bias_pool_kernel(%arg0: i32, %arg1: memref<144x256xbf16, #tpu.memory_space<vmem>>, %arg2: memref<64x144xbf16, #tpu.memory_space<vmem>>, %arg3: memref<1x256xi32, #tpu.memory_space<vmem>>, %arg4: memref<8x256xf32, #tpu.memory_space<vmem>>, %arg5: memref<8x256xi32, #tpu.memory_space<vmem>>) attributes {dimension_semantics = [#tpu.dimension_semantics<parallel>], iteration_bounds = array<i64: 2>, scalar_prefetch = 0 : i64, scratch_operands = 0 : i64, tpu.core_type = #tpu.core_type<tc>, window_params = [{transform_indices = @transform_0, window_bounds = array<i64: 144, 256>}, {pipeline_mode = #tpu.pipeline_mode<synchronous>, transform_indices = @transform_1, window_bounds = array<i64: 64, 144>}, {transform_indices = @transform_2, window_bounds = array<i64: 1, 256>}, {transform_indices = @transform_3, window_bounds = array<i64: 8, 256>}, {transform_indices = @transform_4, window_bounds = array<i64: 8, 256>}]} {
    %c0 = arith.constant 0 : index
    %c0_0 = arith.constant 0 : index
    %0 = vector.load %arg2[%c0, %c0_0] : memref<64x144xbf16, #tpu.memory_space<vmem>>, vector<64x144xbf16>
    %c0_1 = arith.constant 0 : index
    %c0_2 = arith.constant 0 : index
    %1 = vector.load %arg1[%c0_1, %c0_2] : memref<144x256xbf16, #tpu.memory_space<vmem>>, vector<144x256xbf16>
    %cst = arith.constant dense<0.000000e+00> : vector<64x256xf32>
    %2 = tpu.matmul %0, %1, %cst {dimension_numbers = #tpu.dot_dimension_numbers<[1], [0], [0], [1], [0, 0, 1, 1], [], []>} : vector<64x144xbf16>, vector<144x256xbf16>, vector<64x256xf32> -> vector<64x256xf32>
    %c0_3 = arith.constant 0 : index
    %c0_4 = arith.constant 0 : index
    %3 = vector.load %arg3[%c0_3, %c0_4] : memref<1x256xi32, #tpu.memory_space<vmem>>, vector<1x256xi32>
    %4 = vector.shape_cast %3 : vector<1x256xi32> to vector<1x256xi32>
    %5 = vector.broadcast %4 : vector<1x256xi32> to vector<8x256xi32>
    %6 = vector.extract_strided_slice %2 {offsets = [0, 0], sizes = [8, 256], strides = [1, 1]} : vector<64x256xf32> to vector<8x256xf32>
    %7 = vector.extract_strided_slice %2 {offsets = [8, 0], sizes = [8, 256], strides = [1, 1]} : vector<64x256xf32> to vector<8x256xf32>
    %8 = arith.cmpf ogt, %7, %6 : vector<8x256xf32>
    %9 = arith.select %8, %7, %6 : vector<8x256xi1>, vector<8x256xf32>
    %c1_i32 = arith.constant 1 : i32
    %10 = vector.broadcast %c1_i32 : i32 to vector<8x256xi32>
    %11 = arith.addi %5, %10 : vector<8x256xi32>
    %12 = arith.select %8, %11, %5 : vector<8x256xi1>, vector<8x256xi32>
    %13 = vector.extract_strided_slice %2 {offsets = [16, 0], sizes = [8, 256], strides = [1, 1]} : vector<64x256xf32> to vector<8x256xf32>
    %14 = arith.cmpf ogt, %13, %9 : vector<8x256xf32>
    %15 = arith.select %14, %13, %9 : vector<8x256xi1>, vector<8x256xf32>
    %c16_i32 = arith.constant 16 : i32
    %16 = vector.broadcast %c16_i32 : i32 to vector<8x256xi32>
    %17 = arith.addi %5, %16 : vector<8x256xi32>
    %18 = arith.select %14, %17, %12 : vector<8x256xi1>, vector<8x256xi32>
    %19 = vector.extract_strided_slice %2 {offsets = [24, 0], sizes = [8, 256], strides = [1, 1]} : vector<64x256xf32> to vector<8x256xf32>
    %20 = arith.cmpf ogt, %19, %15 : vector<8x256xf32>
    %21 = arith.select %20, %19, %15 : vector<8x256xi1>, vector<8x256xf32>
    %c17_i32 = arith.constant 17 : i32
    %22 = vector.broadcast %c17_i32 : i32 to vector<8x256xi32>
    %23 = arith.addi %5, %22 : vector<8x256xi32>
    %24 = arith.select %20, %23, %18 : vector<8x256xi1>, vector<8x256xi32>
    %25 = vector.extract_strided_slice %2 {offsets = [32, 0], sizes = [8, 256], strides = [1, 1]} : vector<64x256xf32> to vector<8x256xf32>
    %26 = arith.cmpf ogt, %25, %21 : vector<8x256xf32>
    %27 = arith.select %26, %25, %21 : vector<8x256xi1>, vector<8x256xf32>
    %c256_i32 = arith.constant 256 : i32
    %28 = vector.broadcast %c256_i32 : i32 to vector<8x256xi32>
    %29 = arith.addi %5, %28 : vector<8x256xi32>
    %30 = arith.select %26, %29, %24 : vector<8x256xi1>, vector<8x256xi32>
    %31 = vector.extract_strided_slice %2 {offsets = [40, 0], sizes = [8, 256], strides = [1, 1]} : vector<64x256xf32> to vector<8x256xf32>
    %32 = arith.cmpf ogt, %31, %27 : vector<8x256xf32>
    %33 = arith.select %32, %31, %27 : vector<8x256xi1>, vector<8x256xf32>
    %c257_i32 = arith.constant 257 : i32
    %34 = vector.broadcast %c257_i32 : i32 to vector<8x256xi32>
    %35 = arith.addi %5, %34 : vector<8x256xi32>
    %36 = arith.select %32, %35, %30 : vector<8x256xi1>, vector<8x256xi32>
    %37 = vector.extract_strided_slice %2 {offsets = [48, 0], sizes = [8, 256], strides = [1, 1]} : vector<64x256xf32> to vector<8x256xf32>
    %38 = arith.cmpf ogt, %37, %33 : vector<8x256xf32>
    %39 = arith.select %38, %37, %33 : vector<8x256xi1>, vector<8x256xf32>
    %c272_i32 = arith.constant 272 : i32
    %40 = vector.broadcast %c272_i32 : i32 to vector<8x256xi32>
    %41 = arith.addi %5, %40 : vector<8x256xi32>
    %42 = arith.select %38, %41, %36 : vector<8x256xi1>, vector<8x256xi32>
    %43 = vector.extract_strided_slice %2 {offsets = [56, 0], sizes = [8, 256], strides = [1, 1]} : vector<64x256xf32> to vector<8x256xf32>
    %44 = arith.cmpf ogt, %43, %39 : vector<8x256xf32>
    %45 = arith.select %44, %43, %39 : vector<8x256xi1>, vector<8x256xf32>
    %c273_i32 = arith.constant 273 : i32
    %46 = vector.broadcast %c273_i32 : i32 to vector<8x256xi32>
    %47 = arith.addi %5, %46 : vector<8x256xi32>
    %48 = arith.select %44, %47, %42 : vector<8x256xi1>, vector<8x256xi32>
    %c0_5 = arith.constant 0 : index
    %c0_6 = arith.constant 0 : index
    %49 = vector.load %arg4[%c0_5, %c0_6] : memref<8x256xf32, #tpu.memory_space<vmem>>, vector<8x256xf32>
    tpu.vector_store %arg4[%c0_5, %c0_6], %45 {strides = array<i32>} : memref<8x256xf32, #tpu.memory_space<vmem>>, vector<8x256xf32>,
    %c0_7 = arith.constant 0 : index
    %c0_8 = arith.constant 0 : index
    %50 = vector.load %arg5[%c0_7, %c0_8] : memref<8x256xi32, #tpu.memory_space<vmem>>, vector<8x256xi32>
    tpu.vector_store %arg5[%c0_7, %c0_8], %48 {strides = array<i32>} : memref<8x256xi32, #tpu.memory_space<vmem>>, vector<8x256xi32>,
    return
  }
  func.func @transform_0(%arg0: i32) -> (i32, i32) {
    %c0_i32 = arith.constant 0 : i32
    %c0_i32_0 = arith.constant 0 : i32
    return %c0_i32, %arg0 : i32, i32
  }
  func.func @transform_1(%arg0: i32) -> (i32, i32) {
    %c0_i32 = arith.constant 0 : i32
    %c0_i32_0 = arith.constant 0 : i32
    %c0_i32_1 = arith.constant 0 : i32
    return %c0_i32, %c0_i32_0 : i32, i32
  }
  func.func @transform_2(%arg0: i32) -> (i32, i32) {
    %c0_i32 = arith.constant 0 : i32
    %c0_i32_0 = arith.constant 0 : i32
    return %c0_i32, %arg0 : i32, i32
  }
  func.func @transform_3(%arg0: i32) -> (i32, i32) {
    %c0_i32 = arith.constant 0 : i32
    %c0_i32_0 = arith.constant 0 : i32
    return %c0_i32, %arg0 : i32, i32
  }
  func.func @transform_4(%arg0: i32) -> (i32, i32) {
    %c0_i32 = arith.constant 0 : i32
    %c0_i32_0 = arith.constant 0 : i32
    return %c0_i32, %arg0 : i32, i32
  }
}

module attributes {stable_mosaic.version = 11 : i64} {
  func.func @_fused_conv_bias_pool_kernel(%arg0: i32, %arg1: memref<528x128xbf16, #tpu.memory_space<vmem>>, %arg2: memref<128x528xbf16, #tpu.memory_space<vmem>>, %arg3: memref<1x128xi32, #tpu.memory_space<vmem>>, %arg4: memref<16x128xf32, #tpu.memory_space<vmem>>, %arg5: memref<16x128xi32, #tpu.memory_space<vmem>>) attributes {dimension_semantics = [#tpu.dimension_semantics<parallel>], iteration_bounds = array<i64: 1>, scalar_prefetch = 0 : i64, scratch_operands = 0 : i64, tpu.core_type = #tpu.core_type<tc>, window_params = [{transform_indices = @transform_0, window_bounds = array<i64: 528, 128>}, {pipeline_mode = #tpu.pipeline_mode<synchronous>, transform_indices = @transform_1, window_bounds = array<i64: 128, 528>}, {transform_indices = @transform_2, window_bounds = array<i64: 1, 128>}, {transform_indices = @transform_3, window_bounds = array<i64: 16, 128>}, {transform_indices = @transform_4, window_bounds = array<i64: 16, 128>}]} {
    %c0 = arith.constant 0 : index
    %c0_0 = arith.constant 0 : index
    %0 = vector.load %arg2[%c0, %c0_0] : memref<128x528xbf16, #tpu.memory_space<vmem>>, vector<128x528xbf16>
    %c0_1 = arith.constant 0 : index
    %c0_2 = arith.constant 0 : index
    %1 = vector.load %arg1[%c0_1, %c0_2] : memref<528x128xbf16, #tpu.memory_space<vmem>>, vector<528x128xbf16>
    %cst = arith.constant dense<0.000000e+00> : vector<128x128xf32>
    %2 = tpu.matmul %0, %1, %cst {dimension_numbers = #tpu.dot_dimension_numbers<[1], [0], [0], [1], [0, 0, 1, 1], [], []>} : vector<128x528xbf16>, vector<528x128xbf16>, vector<128x128xf32> -> vector<128x128xf32>
    %c0_3 = arith.constant 0 : index
    %c0_4 = arith.constant 0 : index
    %3 = vector.load %arg3[%c0_3, %c0_4] : memref<1x128xi32, #tpu.memory_space<vmem>>, vector<1x128xi32>
    %4 = vector.shape_cast %3 : vector<1x128xi32> to vector<1x128xi32>
    %5 = vector.broadcast %4 : vector<1x128xi32> to vector<16x128xi32>
    %6 = vector.extract_strided_slice %2 {offsets = [0, 0], sizes = [16, 128], strides = [1, 1]} : vector<128x128xf32> to vector<16x128xf32>
    %7 = vector.extract_strided_slice %2 {offsets = [16, 0], sizes = [16, 128], strides = [1, 1]} : vector<128x128xf32> to vector<16x128xf32>
    %8 = arith.cmpf ogt, %7, %6 : vector<16x128xf32>
    %9 = arith.select %8, %7, %6 : vector<16x128xi1>, vector<16x128xf32>
    %c1_i32 = arith.constant 1 : i32
    %10 = vector.broadcast %c1_i32 : i32 to vector<16x128xi32>
    %11 = arith.addi %5, %10 : vector<16x128xi32>
    %12 = arith.select %8, %11, %5 : vector<16x128xi1>, vector<16x128xi32>
    %13 = vector.extract_strided_slice %2 {offsets = [32, 0], sizes = [16, 128], strides = [1, 1]} : vector<128x128xf32> to vector<16x128xf32>
    %14 = arith.cmpf ogt, %13, %9 : vector<16x128xf32>
    %15 = arith.select %14, %13, %9 : vector<16x128xi1>, vector<16x128xf32>
    %c6_i32 = arith.constant 6 : i32
    %16 = vector.broadcast %c6_i32 : i32 to vector<16x128xi32>
    %17 = arith.addi %5, %16 : vector<16x128xi32>
    %18 = arith.select %14, %17, %12 : vector<16x128xi1>, vector<16x128xi32>
    %19 = vector.extract_strided_slice %2 {offsets = [48, 0], sizes = [16, 128], strides = [1, 1]} : vector<128x128xf32> to vector<16x128xf32>
    %20 = arith.cmpf ogt, %19, %15 : vector<16x128xf32>
    %21 = arith.select %20, %19, %15 : vector<16x128xi1>, vector<16x128xf32>
    %c7_i32 = arith.constant 7 : i32
    %22 = vector.broadcast %c7_i32 : i32 to vector<16x128xi32>
    %23 = arith.addi %5, %22 : vector<16x128xi32>
    %24 = arith.select %20, %23, %18 : vector<16x128xi1>, vector<16x128xi32>
    %25 = vector.extract_strided_slice %2 {offsets = [64, 0], sizes = [16, 128], strides = [1, 1]} : vector<128x128xf32> to vector<16x128xf32>
    %26 = arith.cmpf ogt, %25, %21 : vector<16x128xf32>
    %27 = arith.select %26, %25, %21 : vector<16x128xi1>, vector<16x128xf32>
    %c36_i32 = arith.constant 36 : i32
    %28 = vector.broadcast %c36_i32 : i32 to vector<16x128xi32>
    %29 = arith.addi %5, %28 : vector<16x128xi32>
    %30 = arith.select %26, %29, %24 : vector<16x128xi1>, vector<16x128xi32>
    %31 = vector.extract_strided_slice %2 {offsets = [80, 0], sizes = [16, 128], strides = [1, 1]} : vector<128x128xf32> to vector<16x128xf32>
    %32 = arith.cmpf ogt, %31, %27 : vector<16x128xf32>
    %33 = arith.select %32, %31, %27 : vector<16x128xi1>, vector<16x128xf32>
    %c37_i32 = arith.constant 37 : i32
    %34 = vector.broadcast %c37_i32 : i32 to vector<16x128xi32>
    %35 = arith.addi %5, %34 : vector<16x128xi32>
    %36 = arith.select %32, %35, %30 : vector<16x128xi1>, vector<16x128xi32>
    %37 = vector.extract_strided_slice %2 {offsets = [96, 0], sizes = [16, 128], strides = [1, 1]} : vector<128x128xf32> to vector<16x128xf32>
    %38 = arith.cmpf ogt, %37, %33 : vector<16x128xf32>
    %39 = arith.select %38, %37, %33 : vector<16x128xi1>, vector<16x128xf32>
    %c42_i32 = arith.constant 42 : i32
    %40 = vector.broadcast %c42_i32 : i32 to vector<16x128xi32>
    %41 = arith.addi %5, %40 : vector<16x128xi32>
    %42 = arith.select %38, %41, %36 : vector<16x128xi1>, vector<16x128xi32>
    %43 = vector.extract_strided_slice %2 {offsets = [112, 0], sizes = [16, 128], strides = [1, 1]} : vector<128x128xf32> to vector<16x128xf32>
    %44 = arith.cmpf ogt, %43, %39 : vector<16x128xf32>
    %45 = arith.select %44, %43, %39 : vector<16x128xi1>, vector<16x128xf32>
    %c43_i32 = arith.constant 43 : i32
    %46 = vector.broadcast %c43_i32 : i32 to vector<16x128xi32>
    %47 = arith.addi %5, %46 : vector<16x128xi32>
    %48 = arith.select %44, %47, %42 : vector<16x128xi1>, vector<16x128xi32>
    %c0_5 = arith.constant 0 : index
    %c0_6 = arith.constant 0 : index
    %49 = vector.load %arg4[%c0_5, %c0_6] : memref<16x128xf32, #tpu.memory_space<vmem>>, vector<16x128xf32>
    tpu.vector_store %arg4[%c0_5, %c0_6], %45 {strides = array<i32>} : memref<16x128xf32, #tpu.memory_space<vmem>>, vector<16x128xf32>,
    %c0_7 = arith.constant 0 : index
    %c0_8 = arith.constant 0 : index
    %50 = vector.load %arg5[%c0_7, %c0_8] : memref<16x128xi32, #tpu.memory_space<vmem>>, vector<16x128xi32>
    tpu.vector_store %arg5[%c0_7, %c0_8], %48 {strides = array<i32>} : memref<16x128xi32, #tpu.memory_space<vmem>>, vector<16x128xi32>,
    return
  }
  func.func @transform_0(%arg0: i32) -> (i32, i32) {
    %c0_i32 = arith.constant 0 : i32
    %c0_i32_0 = arith.constant 0 : i32
    return %c0_i32, %arg0 : i32, i32
  }
  func.func @transform_1(%arg0: i32) -> (i32, i32) {
    %c0_i32 = arith.constant 0 : i32
    %c0_i32_0 = arith.constant 0 : i32
    %c0_i32_1 = arith.constant 0 : i32
    return %c0_i32, %c0_i32_0 : i32, i32
  }
  func.func @transform_2(%arg0: i32) -> (i32, i32) {
    %c0_i32 = arith.constant 0 : i32
    %c0_i32_0 = arith.constant 0 : i32
    return %c0_i32, %arg0 : i32, i32
  }
  func.func @transform_3(%arg0: i32) -> (i32, i32) {
    %c0_i32 = arith.constant 0 : i32
    %c0_i32_0 = arith.constant 0 : i32
    return %c0_i32, %arg0 : i32, i32
  }
  func.func @transform_4(%arg0: i32) -> (i32, i32) {
    %c0_i32 = arith.constant 0 : i32
    %c0_i32_0 = arith.constant 0 : i32
    return %c0_i32, %arg0 : i32, i32
  }
}

</mosaic_0001>

<llo_original>
// kernel: encoder3d_forward.2
$region0: #{encoder3d_forward.2}
  #allocation0 [shape = 'u32[]', space=smem, size = 0x4, offset = 0x4, fixed_abs, tag = 'smem constant byte address 0x4 - core index']
  #allocation1 [shape = 'u32[144,128]{1,0:T(1,128)}', space=vmem, size = 0x12000, scoped, tag = 'internal scratch']
  %s0 = inlined_call_operand.vmem [shape: bf16[144,512], index: 0, kind: input, shape index: {}]
  %s1 = inlined_call_operand.vmem [shape: bf16[64,144], index: 1, kind: input, shape index: {}]
  %s2 = inlined_call_operand.vmem [shape: s32[1,512], index: 2, kind: input, shape index: {}]
  %s3 = inlined_call_operand.vmem [shape: f32[8,512], index: 3, kind: output, shape index: {0}]
  %s4 = inlined_call_operand.vmem [shape: s32[8,512], index: 4, kind: output, shape index: {1}]
  %5 = xla_tuple %s3, %s4
  %s6 = sld [smem:[#allocation0]]
  $region91: #{encoder3d_forward.2} parent=0
    _
  %s8 = ssub.s32 1, %s6
  %s9 = scalar_select 0, %s8, %s6
  $region1: #{encoder3d_forward.2} parent=0
    #allocation2 [shape = 'u8[147456]{0}', space=vmem, size = 0x24000, scoped, tag = 'input window, operand 0']
    loop: start=0, step=1, limit=4
    $region2: #{encoder3d_forward.2} parent=1 // loop_pre_header
      _
    $region3: #{encoder3d_forward.2} parent=1 // loop_header
      %s11 = sphi 0, %s15
      %p12 = scmp.ge.s32.totalorder %s11, 4
      %s21 = sphi 0, %s23
      %s24 = sphi 0, %s21
      %s25 = sphi 0, %s24
      %s41 = sphi 0, %s25
      %s45 = sphi 0, %s45
      %s47 = sphi 0, %s45
      %s48 = sphi 0, %s47
      %s62 = sphi 0, %s48
      %s68 = sphi 0, %s70
      %s71 = sphi 0, %s68
      %s72 = sphi 0, %s71
      %s88 = sphi 0, %s72
      %s94 = sphi 0, %s96
      %s97 = sphi 0, %s94
      %s98 = sphi 0, %s97
      %s114 = sphi 0, %s98
      %s120 = sphi 0, %s122
      %s123 = sphi 0, %s120
      %s124 = sphi 0, %s123
      %s140 = sphi 0, %s124
    $region4: #{encoder3d_forward.2} parent=1 // loop_header_branch
      %14 = sbr.rel (%p12) target = $region8
    $region5: #{encoder3d_forward.2} parent=1 // loop_body
      %s16 = ssub.s32 %s11, 1
      %s17 = ssub.s32 %s11, 2
      %s18 = sadd.s32 %s11, 1
      %s19 = ssub.s32 %s11, %s18
      %p20 = scmp.eq.s32.totalorder %s19, 0
      %s22 = sadd.s32 %s21, 1
      %s23 = scalar_select %p20, %s21, %s22
      %p26 = pneg %p20
      %p27 = scmp.eq.s32.totalorder %s11, 1
      %p28 = por %p26, %p27
      %p29 = scmp.ne.s32.totalorder %s21, %s24
      %p30 = scmp.eq.s32.totalorder %s11, 0
      %p31 = por %p29, %p30
      %p32 = scmp.ne.s32.totalorder %s21, %s24
      %p33 = scmp.eq.s32.totalorder %s16, 1
      %p34 = por %p32, %p33
      %p35 = scmp.ne.s32.totalorder %s24, %s25
      %p36 = scmp.eq.s32.totalorder %s16, 0
      %p37 = por %p35, %p36
      %p38 = scmp.ne.s32.totalorder %s24, %s25
      %p39 = scmp.eq.s32.totalorder %s17, 1
      %p40 = por %p38, %p39
      %p42 = scmp.ne.s32.totalorder %s25, %s41
      %p43 = scmp.eq.s32.totalorder %s17, 0
      %p44 = por %p42, %p43
      %s46 = sadd.s32 %s45, 1
      %p49 = scmp.eq.s32.totalorder %s11, 1
      %p50 = scmp.ne.s32.totalorder %s45, %s47
      %p51 = scmp.eq.s32.totalorder %s11, 0
      %p52 = por %p50, %p51
      %p53 = scmp.ne.s32.totalorder %s45, %s47
      %p54 = scmp.eq.s32.totalorder %s16, 1
      %p55 = por %p53, %p54
      %p56 = scmp.ne.s32.totalorder %s47, %s48
      %p57 = scmp.eq.s32.totalorder %s16, 0
      %p58 = por %p56, %p57
      %p59 = scmp.ne.s32.totalorder %s47, %s48
      %p60 = scmp.eq.s32.totalorder %s17, 1
      %p61 = por %p59, %p60
      %p63 = scmp.ne.s32.totalorder %s48, %s62
      %p64 = scmp.eq.s32.totalorder %s17, 0
      %p65 = por %p63, %p64
      %s66 = ssub.s32 %s11, %s18
      %p67 = scmp.eq.s32.totalorder %s66, 0
      %s69 = sadd.s32 %s68, 1
      %s70 = scalar_select %p67, %s68, %s69
      %p73 = pneg %p67
      %p74 = scmp.eq.s32.totalorder %s11, 1
      %p75 = por %p73, %p74
      %p76 = scmp.ne.s32.totalorder %s68, %s71
      %p77 = scmp.eq.s32.totalorder %s11, 0
      %p78 = por %p76, %p77
      %p79 = scmp.ne.s32.totalorder %s68, %s71
      %p80 = scmp.eq.s32.totalorder %s16, 1
      %p81 = por %p79, %p80
      %p82 = scmp.ne.s32.totalorder %s71, %s72
      %p83 = scmp.eq.s32.totalorder %s16, 0
      %p84 = por %p82, %p83
      %p85 = scmp.ne.s32.totalorder %s71, %s72
      %p86 = scmp.eq.s32.totalorder %s17, 1
      %p87 = por %p85, %p86
      %p89 = scmp.ne.s32.totalorder %s72, %s88
      %p90 = scmp.eq.s32.totalorder %s17, 0
      %p91 = por %p89, %p90
      %s92 = ssub.s32 %s11, %s18
      %p93 = scmp.eq.s32.totalorder %s92, 0
      %s95 = sadd.s32 %s94, 1
      %s96 = scalar_select %p93, %s94, %s95
      %p99 = pneg %p93
      %p100 = scmp.eq.s32.totalorder %s11, 1
      %p101 = por %p99, %p100
      %p102 = scmp.ne.s32.totalorder %s94, %s97
      %p103 = scmp.eq.s32.totalorder %s11, 0
      %p104 = por %p102, %p103
      %p105 = scmp.ne.s32.totalorder %s94, %s97
      %p106 = scmp.eq.s32.totalorder %s16, 1
      %p107 = por %p105, %p106
      %p108 = scmp.ne.s32.totalorder %s97, %s98
      %p109 = scmp.eq.s32.totalorder %s16, 0
      %p110 = por %p108, %p109
      %p111 = scmp.ne.s32.totalorder %s97, %s98
      %p112 = scmp.eq.s32.totalorder %s17, 1
      %p113 = por %p111, %p112
      %p115 = scmp.ne.s32.totalorder %s98, %s114
      %p116 = scmp.eq.s32.totalorder %s17, 0
      %p117 = por %p115, %p116
      %s118 = ssub.s32 %s11, %s18
      %p119 = scmp.eq.s32.totalorder %s118, 0
      %s121 = sadd.s32 %s120, 1
      %s122 = scalar_select %p119, %s120, %s121
      %p125 = pneg %p119
      %p126 = scmp.eq.s32.totalorder %s11, 1
      %p127 = por %p125, %p126
      %p128 = scmp.ne.s32.totalorder %s120, %s123
      %p129 = scmp.eq.s32.totalorder %s11, 0
      %p130 = por %p128, %p129
      %p131 = scmp.ne.s32.totalorder %s120, %s123
      %p132 = scmp.eq.s32.totalorder %s16, 1
      %p133 = por %p131, %p132
      %p134 = scmp.ne.s32.totalorder %s123, %s124
      %p135 = scmp.eq.s32.totalorder %s16, 0
      %p136 = por %p134, %p135
      %p137 = scmp.ne.s32.totalorder %s123, %s124
      %p138 = scmp.eq.s32.totalorder %s17, 1
      %p139 = por %p137, %p138
      %p141 = scmp.ne.s32.totalorder %s124, %s140
      %p142 = scmp.eq.s32.totalorder %s17, 0
      %p143 = por %p141, %p142
      %p144 = scmp.le.s32.totalorder 1, %s11
      %p145 = scmp.lt.s32.totalorder %s11, 3
      %p146 = pnand %p144, %p145
      %p147 = pneg %p146
      // Predicated region
      $region9: #{encoder3d_forward.2} parent=5 // pred_check
        _
      $region10: #{encoder3d_forward.2} parent=5 // pred_check_branch
        %149 = sbr.rel (%p146) target = $region12
      $region11: #{encoder3d_forward.2} parent=5 // pred_region
        %s150 = ssub.s32 %s11, 1
        // Predicated region
        $region13: #{encoder3d_forward.2} parent=11 // pred_check
          %p151 = pneg %p58
        $region14: #{encoder3d_forward.2} parent=11 // pred_check_branch
          %153 = sbr.rel (%p151) target = $region16
        $region15: #{encoder3d_forward.2} parent=11 // pred_region
          _
        $region16: #{encoder3d_forward.2} parent=11 // pred_fallthru
          _
      $region12: #{encoder3d_forward.2} parent=5 // pred_fallthru
        _
      %p154 = scmp.lt.s32.totalorder %s11, 2
      // Predicated region
      $region17: #{encoder3d_forward.2} parent=5 // pred_check
        %p155 = pneg %p154
      $region18: #{encoder3d_forward.2} parent=5 // pred_check_branch
        %157 = sbr.rel (%p155) target = $region20
      $region19: #{encoder3d_forward.2} parent=5 // pred_region
        // Predicated region
        $region21: #{encoder3d_forward.2} parent=19 // pred_check
          %p158 = pneg %p31
        $region22: #{encoder3d_forward.2} parent=19 // pred_check_branch
          %160 = sbr.rel (%p158) target = $region24
        $region23: #{encoder3d_forward.2} parent=19 // pred_region
          %s161 = sand.u32 %s21, 1
          %s162 = sand.u32 %s21, 1
          %s163 = smul.addr %s162, 144
          %s164 = scalar_lea.vmem [#allocation2], %s163
          %s165 = smul.u32 2, %s11
          %s166 = smul.addr %s165, 4
          %s167 = scalar_lea.vmem %s0, %s166
          // Predicated region
          $region25: #{encoder3d_forward.2} parent=23 // pred_check
            _
          $region26: #{encoder3d_forward.2} parent=23 // pred_check_branch
            %169 = sbr.rel (0) target = $region28
          $region27: #{encoder3d_forward.2} parent=23 // pred_region
            // Predicated region
            $region29: #{encoder3d_forward.2} parent=27 // pred_check
              _
            $region30: #{encoder3d_forward.2} parent=27 // pred_check_branch
              %171 = sbr.rel (0) target = $region32
            $region31: #{encoder3d_forward.2} parent=27 // pred_region
              // Predicated region
              $region44: #{encoder3d_forward.2} parent=31 // pred_check
                _
              $region45: #{encoder3d_forward.2} parent=31 // pred_check_branch
                %220 = sbr.rel (0) target = $region47
              $region46: #{encoder3d_forward.2} parent=31 // pred_region
                loop: start=0, step=1, limit=1
                $region48: #{encoder3d_forward.2} parent=46 // loop_pre_header
                  _
                $region49: #{encoder3d_forward.2} parent=46 // loop_header
                  %s222 = sphi 0, %s226
                  %p223 = scmp.ge.s32.totalorder %s222, 1
                  %s227 = sphi %s167, %s167
                  %s228 = sphi %s164, %s164
                $region50: #{encoder3d_forward.2} parent=46 // loop_header_branch
                  %225 = sbr.rel (%p223) target = $region54
                $region51: #{encoder3d_forward.2} parent=46 // loop_body
                  %v229 = vld [vmem:[%s227] sm:$0xff]
                  %230 = vst [vmem:[%s228] sm:$0xff] %v229
                  %v231 = vld [vmem:[%s227 + $0x10] sm:$0xff]
                  %232 = vst [vmem:[%s228 + $0x8] sm:$0xff] %v231
                  %v233 = vld [vmem:[%s227 + $0x20] sm:$0xff]
                  %234 = vst [vmem:[%s228 + $0x10] sm:$0xff] %v233
                  %v235 = vld [vmem:[%s227 + $0x30] sm:$0xff]
                  %236 = vst [vmem:[%s228 + $0x18] sm:$0xff] %v235
                  %v237 = vld [vmem:[%s227 + $0x40] sm:$0xff]
                  %238 = vst [vmem:[%s228 + $0x20] sm:$0xff] %v237
                  %v239 = vld [vmem:[%s227 + $0x50] sm:$0xff]
                  %240 = vst [vmem:[%s228 + $0x28] sm:$0xff] %v239
                  %v241 = vld [vmem:[%s227 + $0x60] sm:$0xff]
                  %242 = vst [vmem:[%s228 + $0x30] sm:$0xff] %v241
                  %v243 = vld [vmem:[%s227 + $0x70] sm:$0xff]
                  %244 = vst [vmem:[%s228 + $0x38] sm:$0xff] %v243
                  %v245 = vld [vmem:[%s227 + $0x80] sm:$0xff]
                  %246 = vst [vmem:[%s228 + $0x40] sm:$0xff] %v245
                  %v247 = vld [vmem:[%s227 + $0x90] sm:$0xff]
                  %248 = vst [vmem:[%s228 + $0x48] sm:$0xff] %v247
                  %v249 = vld [vmem:[%s227 + $0xa0] sm:$0xff]
                  %250 = vst [vmem:[%s228 + $0x50] sm:$0xff] %v249
                  %v251 = vld [vmem:[%s227 + $0xb0] sm:$0xff]
                  %252 = vst [vmem:[%s228 + $0x58] sm:$0xff] %v251
                  %v253 = vld [vmem:[%s227 + $0xc0] sm:$0xff]
                  %254 = vst [vmem:[%s228 + $0x60] sm:$0xff] %v253
                  %v255 = vld [vmem:[%s227 + $0xd0] sm:$0xff]
                  %256 = vst [vmem:[%s228 + $0x68] sm:$0xff] %v255
                  %v257 = vld [vmem:[%s227 + $0xe0] sm:$0xff]
                  %258 = vst [vmem:[%s228 + $0x70] sm:$0xff] %v257
                  %v259 = vld [vmem:[%s227 + $0xf0] sm:$0xff]
                  %260 = vst [vmem:[%s228 + $0x78] sm:$0xff] %v259
                  %v261 = vld [vmem:[%s227 + $0x100] sm:$0xff]
                  %262 = vst [vmem:[%s228 + $0x80] sm:$0xff] %v261
                  %v263 = vld [vmem:[%s227 + $0x110] sm:$0xff]
                  %264 = vst [vmem:[%s228 + $0x88] sm:$0xff] %v263
                $region52: #{encoder3d_forward.2} parent=46 // loop_footer
                  %s226 = sadd.s32 1, %s222
                $region53: #{encoder3d_forward.2} parent=46 // loop_footer_branch
                  %221 = sbr.rel target = $region49
                $region54: #{encoder3d_forward.2} parent=46 // loop_exit
                  _
              $region47: #{encoder3d_forward.2} parent=31 // pred_fallthru
                _
              // Predicated region
              $region55: #{encoder3d_forward.2} parent=31 // pred_check
                _
              $region56: #{encoder3d_forward.2} parent=31 // pred_check_branch
                %266 = sbr.rel target = $region58
              $region57: #{encoder3d_forward.2} parent=31 // pred_region
                _
              $region58: #{encoder3d_forward.2} parent=31 // pred_fallthru
                _
            $region32: #{encoder3d_forward.2} parent=27 // pred_fallthru
              _
            // Predicated region
            $region33: #{encoder3d_forward.2} parent=27 // pred_check
              _
            $region34: #{encoder3d_forward.2} parent=27 // pred_check_branch
              %173 = sbr.rel target = $region36
            $region35: #{encoder3d_forward.2} parent=27 // pred_region
              loop: start=0, step=1, limit=1
              $region37: #{encoder3d_forward.2} parent=35 // loop_pre_header
                _
              $region38: #{encoder3d_forward.2} parent=35 // loop_header
                %s176 = sphi 0, %s180
                %p177 = scmp.ge.s32.totalorder %s176, 1
                %s181 = sphi %s167, %s167
                %s182 = sphi %s164, %s164
              $region39: #{encoder3d_forward.2} parent=35 // loop_header_branch
                %179 = sbr.rel (%p177) target = $region43
              $region40: #{encoder3d_forward.2} parent=35 // loop_body
                %v183 = vld [vmem:[%s181] sm:$0xff]
                %184 = vst [vmem:[%s182] sm:$0xff] %v183
                %v185 = vld [vmem:[%s181 + $0x10] sm:$0xff]
                %186 = vst [vmem:[%s182 + $0x8] sm:$0xff] %v185
                %v187 = vld [vmem:[%s181 + $0x20] sm:$0xff]
                %188 = vst [vmem:[%s182 + $0x10] sm:$0xff] %v187
                %v189 = vld [vmem:[%s181 + $0x30] sm:$0xff]
                %190 = vst [vmem:[%s182 + $0x18] sm:$0xff] %v189
                %v191 = vld [vmem:[%s181 + $0x40] sm:$0xff]
                %192 = vst [vmem:[%s182 + $0x20] sm:$0xff] %v191
                %v193 = vld [vmem:[%s181 + $0x50] sm:$0xff]
                %194 = vst [vmem:[%s182 + $0x28] sm:$0xff] %v193
                %v195 = vld [vmem:[%s181 + $0x60] sm:$0xff]
                %196 = vst [vmem:[%s182 + $0x30] sm:$0xff] %v195
                %v197 = vld [vmem:[%s181 + $0x70] sm:$0xff]
                %198 = vst [vmem:[%s182 + $0x38] sm:$0xff] %v197
                %v199 = vld [vmem:[%s181 + $0x80] sm:$0xff]
                %200 = vst [vmem:[%s182 + $0x40] sm:$0xff] %v199
                %v201 = vld [vmem:[%s181 + $0x90] sm:$0xff]
                %202 = vst [vmem:[%s182 + $0x48] sm:$0xff] %v201
                %v203 = vld [vmem:[%s181 + $0xa0] sm:$0xff]
                %204 = vst [vmem:[%s182 + $0x50] sm:$0xff] %v203
                %v205 = vld [vmem:[%s181 + $0xb0] sm:$0xff]
                %206 = vst [vmem:[%s182 + $0x58] sm:$0xff] %v205
                %v207 = vld [vmem:[%s181 + $0xc0] sm:$0xff]
                %208 = vst [vmem:[%s182 + $0x60] sm:$0xff] %v207
                %v209 = vld [vmem:[%s181 + $0xd0] sm:$0xff]
                %210 = vst [vmem:[%s182 + $0x68] sm:$0xff] %v209
                %v211 = vld [vmem:[%s181 + $0xe0] sm:$0xff]
                %212 = vst [vmem:[%s182 + $0x70] sm:$0xff] %v211
                %v213 = vld [vmem:[%s181 + $0xf0] sm:$0xff]
                %214 = vst [vmem:[%s182 + $0x78] sm:$0xff] %v213
                %v215 = vld [vmem:[%s181 + $0x100] sm:$0xff]
                %216 = vst [vmem:[%s182 + $0x80] sm:$0xff] %v215
                %v217 = vld [vmem:[%s181 + $0x110] sm:$0xff]
                %218 = vst [vmem:[%s182 + $0x88] sm:$0xff] %v217
              $region41: #{encoder3d_forward.2} parent=35 // loop_footer
                %s180 = sadd.s32 1, %s176
              $region42: #{encoder3d_forward.2} parent=35 // loop_footer_branch
                %175 = sbr.rel target = $region38
              $region43: #{encoder3d_forward.2} parent=35 // loop_exit
                _
            $region36: #{encoder3d_forward.2} parent=27 // pred_fallthru
              _
          $region28: #{encoder3d_forward.2} parent=23 // pred_fallthru
            _
          %267 = vnop
        $region24: #{encoder3d_forward.2} parent=19 // pred_fallthru
          _
        // Predicated region
        $region59: #{encoder3d_forward.2} parent=19 // pred_check
          %p268 = pneg %p78
        $region60: #{encoder3d_forward.2} parent=19 // pred_check_branch
          %270 = sbr.rel (%p268) target = $region62
        $region61: #{encoder3d_forward.2} parent=19 // pred_region
          %s271 = smul.u32 2, %s11
          %p272 = scmp.lt.s32.totalorder %s271, 3
          %s273 = scalar_select %p272, %s271, 3
          %s274 = scalar_lea.vmem %s2, %s273
          %s275 = smul.u32 2, %s11
        $region62: #{encoder3d_forward.2} parent=19 // pred_fallthru
          _
      $region20: #{encoder3d_forward.2} parent=5 // pred_fallthru
        _
      %p276 = scmp.le.s32.totalorder 1, %s11
      %p277 = scmp.lt.s32.totalorder %s11, 3
      %p278 = pnand %p276, %p277
      %p279 = pneg %p278
      // Predicated region
      $region63: #{encoder3d_forward.2} parent=5 // pred_check
        _
      $region64: #{encoder3d_forward.2} parent=5 // pred_check_branch
        %281 = sbr.rel (%p278) target = $region66
      $region65: #{encoder3d_forward.2} parent=5 // pred_region
        %s282 = ssub.s32 %s11, 1
        %s283 = sand.u32 %s24, 1
        %s284 = sand.u32 %s24, 1
        %s285 = smul.addr %s284, 144
        %s286 = scalar_lea.vmem [#allocation2], %s285
        // Predicated region
        $region67: #{encoder3d_forward.2} parent=65 // pred_check
          %p287 = pneg %p37
        $region68: #{encoder3d_forward.2} parent=65 // pred_check_branch
          %289 = sbr.rel (%p287) target = $region70
        $region69: #{encoder3d_forward.2} parent=65 // pred_region
          _
        $region70: #{encoder3d_forward.2} parent=65 // pred_fallthru
          _
        %s290 = sand.u32 %s24, 1
        %s291 = sand.u32 %s24, 1
        %s292 = smul.addr %s291, 144
        %s293 = scalar_lea.vmem [#allocation2], %s292
        %p294 = pneg %p37
        %p295 = pneg %p34
        %p296 = pneg %p58
        %p297 = pneg %p55
        %s298 = smul.u32 2, %s16
        %p299 = scmp.lt.s32.totalorder %s298, 3
        %s300 = scalar_select %p299, %s298, 3
        %s301 = scalar_lea.vmem %s2, %s300
        %p302 = pneg %p84
        %p303 = pneg %p81
        %p304 = pneg %p110
        %p305 = pneg %p107
        %s306 = smul.u32 2, %s16
        %p307 = scmp.lt.s32.totalorder %s306, 3
        %s308 = scalar_select %p307, %s306, 3
        %s309 = smul.addr %s308, 8
        %s310 = scalar_lea.vmem %s3, %s309
        %p311 = pneg %p136
        %p312 = pneg %p133
        %s313 = smul.u32 2, %s16
        %p314 = scmp.lt.s32.totalorder %s313, 3
        %s315 = scalar_select %p314, %s313, 3
        %s316 = smul.addr %s315, 8
        %s317 = scalar_lea.vmem %s4, %s316
        %s318 = smul.u32 2, %s16
        %s319 = smul.u32 2, %s16
        %p320 = scmp.lt.s32.totalorder %s319, 3
        %s321 = scalar_select %p320, %s319, 3
        %s322 = scalar_lea.vmem %s2, %s321
        %s323 = smul.u32 2, %s16
        %s324 = smul.u32 2, %s16
        %p325 = scmp.lt.s32.totalorder %s324, 3
        %s326 = scalar_select %p325, %s324, 3
        %s327 = smul.addr %s326, 8
        %s328 = scalar_lea.vmem %s3, %s327
        %s329 = smul.u32 2, %s16
        %s330 = smul.u32 2, %s16
        %p331 = scmp.lt.s32.totalorder %s330, 3
        %s332 = scalar_select %p331, %s330, 3
        %s333 = smul.addr %s332, 8
        %s334 = scalar_lea.vmem %s4, %s333
        %s335 = smul.u32 2, %s16
        %v337 = vld [vmem:[%s1] sm:$0xff]
        %v338 = vld [vmem:[%s1 + $0x8] sm:$0xff]
        %v339 = vld [vmem:[%s1 + $0x10] sm:$0xff]
        %v340 = vld [vmem:[%s1 + $0x18] sm:$0xff]
        %v341 = vld [vmem:[%s1 + $0x20] sm:$0xff]
        %v342 = vld [vmem:[%s1 + $0x28] sm:$0xff]
        %v343 = vld [vmem:[%s1 + $0x30] sm:$0xff]
        %v344 = vld [vmem:[%s1 + $0x38] sm:$0xff]
        %v345 = vld [vmem:[%s286] sm:$0xff]
        %v346 = vld [vmem:[%s286 + $0x8] sm:$0xff]
        %v347 = vld [vmem:[%s286 + $0x10] sm:$0xff]
        %v348 = vld [vmem:[%s286 + $0x18] sm:$0xff]
        %v349 = vld [vmem:[%s286 + $0x20] sm:$0xff]
        %v350 = vld [vmem:[%s286 + $0x28] sm:$0xff]
        %v351 = vld [vmem:[%s286 + $0x30] sm:$0xff]
        %v352 = vld [vmem:[%s286 + $0x38] sm:$0xff]
        %v353 = vld [vmem:[%s286 + $0x40] sm:$0xff]
        %v354 = vld [vmem:[%s286 + $0x48] sm:$0xff]
        %v355 = vld [vmem:[%s286 + $0x50] sm:$0xff]
        %v356 = vld [vmem:[%s286 + $0x58] sm:$0xff]
        %v357 = vld [vmem:[%s286 + $0x60] sm:$0xff]
        %v358 = vld [vmem:[%s286 + $0x68] sm:$0xff]
        %v359 = vld [vmem:[%s286 + $0x70] sm:$0xff]
        %v360 = vld [vmem:[%s286 + $0x78] sm:$0xff]
        %v361 = vld [vmem:[%s286 + $0x80] sm:$0xff]
        %v362 = vld [vmem:[%s286 + $0x88] sm:$0xff]
        %v371 = vunpack.c.l.b16 %v337
        %v372 = vunpack.c.h.b16 %v337
        %v373 = vunpack.c.l.b16 %v338
        %v374 = vunpack.c.h.b16 %v338
        %v375 = vunpack.c.l.b16 %v339
        %v376 = vunpack.c.h.b16 %v339
        %v377 = vunpack.c.l.b16 %v340
        %v378 = vunpack.c.h.b16 %v340
        %v379 = vunpack.c.l.b16 %v341
        %v380 = vunpack.c.h.b16 %v341
        %v381 = vunpack.c.l.b16 %v342
        %v382 = vunpack.c.h.b16 %v342
        %v383 = vunpack.c.l.b16 %v343
        %v384 = vunpack.c.h.b16 %v343
        %v385 = vunpack.c.l.b16 %v344
        %v386 = vunpack.c.h.b16 %v344
        %v387 = vpack.c.b16 %v373, %v371
        %v388 = vpack.c.b16 %v374, %v372
        %v389 = vpack.c.b16 %v377, %v375
        %v390 = vpack.c.b16 %v378, %v376
        %v391 = vpack.c.b16 %v381, %v379
        %v392 = vpack.c.b16 %v382, %v380
        %v393 = vpack.c.b16 %v385, %v383
        %v394 = vpack.c.b16 %v386, %v384
        %v417 = vunpack.c.l.b16 %v345
        %v418 = vunpack.c.h.b16 %v345
        %v419 = vunpack.c.l.b16 %v346
        %v420 = vunpack.c.h.b16 %v346
        %v421 = vunpack.c.l.b16 %v347
        %v422 = vunpack.c.h.b16 %v347
        %v423 = vunpack.c.l.b16 %v348
        %v424 = vunpack.c.h.b16 %v348
        %v425 = vunpack.c.l.b16 %v349
        %v426 = vunpack.c.h.b16 %v349
        %v427 = vunpack.c.l.b16 %v350
        %v428 = vunpack.c.h.b16 %v350
        %v429 = vunpack.c.l.b16 %v351
        %v430 = vunpack.c.h.b16 %v351
        %v431 = vunpack.c.l.b16 %v352
        %v432 = vunpack.c.h.b16 %v352
        %v433 = vunpack.c.l.b16 %v353
        %v434 = vunpack.c.h.b16 %v353
        %v435 = vunpack.c.l.b16 %v354
        %v436 = vunpack.c.h.b16 %v354
        %v437 = vunpack.c.l.b16 %v355
        %v438 = vunpack.c.h.b16 %v355
        %v439 = vunpack.c.l.b16 %v356
        %v440 = vunpack.c.h.b16 %v356
        %v441 = vunpack.c.l.b16 %v357
        %v442 = vunpack.c.h.b16 %v357
        %v443 = vunpack.c.l.b16 %v358
        %v444 = vunpack.c.h.b16 %v358
        %v445 = vunpack.c.l.b16 %v359
        %v446 = vunpack.c.h.b16 %v359
        %v447 = vunpack.c.l.b16 %v360
        %v448 = vunpack.c.h.b16 %v360
        %v449 = vunpack.c.l.b16 %v361
        %v450 = vunpack.c.h.b16 %v361
        %v451 = vunpack.c.l.b16 %v362
        %v452 = vunpack.c.h.b16 %v362
        %v453 = vpack.c.b16 %v419, %v417
        %v454 = vpack.c.b16 %v420, %v418
        %v455 = vpack.c.b16 %v423, %v421
        %v456 = vpack.c.b16 %v424, %v422
        %v457 = vpack.c.b16 %v427, %v425
        %v458 = vpack.c.b16 %v428, %v426
        %v459 = vpack.c.b16 %v431, %v429
        %v460 = vpack.c.b16 %v432, %v430
        %v461 = vpack.c.b16 %v435, %v433
        %v462 = vpack.c.b16 %v436, %v434
        %v463 = vpack.c.b16 %v439, %v437
        %v464 = vpack.c.b16 %v440, %v438
        %v465 = vpack.c.b16 %v443, %v441
        %v466 = vpack.c.b16 %v444, %v442
        %v467 = vpack.c.b16 %v447, %v445
        %v468 = vpack.c.b16 %v448, %v446
        %v469 = vpack.c.b16 %v451, %v449
        %v470 = vpack.c.b16 %v452, %v450
        %vm489 = vcmask 130048
        %v491 = vsel %vm489, %v388, 0
        %v494 = vsel %vm489, %v390, 0
        %v497 = vsel %vm489, %v392, 0
        %v500 = vsel %vm489, %v394, 0
        %502 = vmatprep.subr.bf16.mxu0 %v454
        %503 = vmatpush1.bf16.msra.mxu0 %v453
        %504 = vmatprep.subr.bf16.mxu0 %v456
        %505 = vmatpush1.bf16.msra.mxu0 %v455
        %506 = vmatprep.subr.bf16.mxu0 %v458
        %507 = vmatpush1.bf16.msra.mxu0 %v457
        %508 = vmatprep.subr.bf16.mxu0 %v460
        %509 = vmatpush1.bf16.msra.mxu0 %v459
        %510 = vmatprep.subr.bf16.mxu0 %v462
        %511 = vmatpush1.bf16.msra.mxu0 %v461
        %512 = vmatprep.subr.bf16.mxu0 %v464
        %513 = vmatpush1.bf16.msra.mxu0 %v463
        %514 = vmatprep.subr.bf16.mxu0 %v466
        %515 = vmatpush1.bf16.msra.mxu0 %v465
        %516 = vmatprep.subr.bf16.mxu0 %v468
        %517 = vmatpush1.bf16.msra.mxu0 %v467
        %518 = vmatprep.subr.bf16.mxu0 %v470
        %519 = vmatpush1.bf16.msra.mxu0 %v469
        %520 = vmatprep.subr.bf16.mxu0 0
        %521 = vmatpush1.bf16.msra.mxu0 0
        %522 = vmatprep.subr.bf16.mxu0 0
        %523 = vmatpush1.bf16.msra.mxu0 0
        %524 = vmatprep.subr.bf16.mxu0 0
        %525 = vmatpush1.bf16.msra.mxu0 0
        %526 = vmatprep.subr.bf16.mxu0 0
        %527 = vmatpush1.bf16.msra.mxu0 0
        %528 = vmatprep.subr.bf16.mxu0 0
        %529 = vmatpush1.bf16.msra.mxu0 0
        %530 = vmatprep.subr.bf16.mxu0 0
        %531 = vmatpush1.bf16.msra.mxu0 0
        %532 = vmatprep.subr.bf16.mxu0 0
        %533 = vmatpush1.bf16.msra.mxu0 0
        %534 = vmatprep.mubr.bf16.mxu0 %v491
        %535 = vmatmul.mubr.bf16.gmra.mrb[0].mxu0 %v387
        %v536 = vpop.f32.mrb[0].mxu0
        %v537 = vadd.f32 0.0, %v536
        %v538 = vpop.f32.mrb[0].mxu0
        %v539 = vadd.f32 0.0, %v538
        %v540 = vpop.f32.mrb[0].mxu0
        %v541 = vadd.f32 0.0, %v540
        %v542 = vpop.f32.mrb[0].mxu0
        %v543 = vadd.f32 0.0, %v542
        %544 = vmatprep.mubr.bf16.mxu0 %v494
        %545 = vmatmul.mubr.bf16.gmra.mrb[0].mxu0 %v389
        %v546 = vpop.f32.mrb[0].mxu0
        %v547 = vadd.f32 0.0, %v546
        %v548 = vpop.f32.mrb[0].mxu0
        %v549 = vadd.f32 0.0, %v548
        %v550 = vpop.f32.mrb[0].mxu0
        %v551 = vadd.f32 0.0, %v550
        %v552 = vpop.f32.mrb[0].mxu0
        %v553 = vadd.f32 0.0, %v552
        %554 = vmatprep.mubr.bf16.mxu0 %v497
        %555 = vmatmul.mubr.bf16.gmra.mrb[0].mxu0 %v391
        %v556 = vpop.f32.mrb[0].mxu0
        %v557 = vadd.f32 0.0, %v556
        %v558 = vpop.f32.mrb[0].mxu0
        %v559 = vadd.f32 0.0, %v558
        %v560 = vpop.f32.mrb[0].mxu0
        %v561 = vadd.f32 0.0, %v560
        %v562 = vpop.f32.mrb[0].mxu0
        %v563 = vadd.f32 0.0, %v562
        %564 = vmatprep.mubr.bf16.mxu0 %v500
        %565 = vmatmul.mubr.bf16.gmra.mrb[0].mxu0 %v393
        %v566 = vpop.f32.mrb[0].mxu0
        %v567 = vadd.f32 0.0, %v566
        %v568 = vpop.f32.mrb[0].mxu0
        %v569 = vadd.f32 0.0, %v568
        %v570 = vpop.f32.mrb[0].mxu0
        %v571 = vadd.f32 0.0, %v570
        %v572 = vpop.f32.mrb[0].mxu0
        %v573 = vadd.f32 0.0, %v572
        %574 = vdwg.mxu0
        %v575 = vld [vmem:[%s322] sm:$0x3]
        %v576 = vlaneseq
        %v577 = vshrl.u32 %v576, 7
        %v578 = vsub.s32 0, %v577
        %v579 = vrot.slane %v575, %v578
        %v580 = vlaneseq
        %v581 = vshrl.u32 %v580, 7
        %v582 = vsub.s32 1, %v581
        %v583 = vrot.slane %v575, %v582
        %vm584 = vcmp.gt.f32.partialorder %v541, %v537
        %vm585 = vcmp.gt.f32.partialorder %v543, %v539
        %v586 = vsel %vm584, %v541, %v537
        %v587 = vsel %vm585, %v543, %v539
        %v588 = vadd.s32 %v579, 1
        %v589 = vadd.s32 %v583, 1
        %v590 = vsel %vm584, %v588, %v579
        %v591 = vsel %vm585, %v589, %v583
        %vm592 = vcmp.gt.f32.partialorder %v547, %v586
        %vm593 = vcmp.gt.f32.partialorder %v549, %v587
        %v594 = vsel %vm592, %v547, %v586
        %v595 = vsel %vm593, %v549, %v587
        %v596 = vadd.s32 %v579, 16
        %v597 = vadd.s32 %v583, 16
        %v598 = vsel %vm592, %v596, %v590
        %v599 = vsel %vm593, %v597, %v591
        %vm600 = vcmp.gt.f32.partialorder %v551, %v594
        %vm601 = vcmp.gt.f32.partialorder %v553, %v595
        %v602 = vsel %vm600, %v551, %v594
        %v603 = vsel %vm601, %v553, %v595
        %v604 = vadd.s32 %v579, 17
        %v605 = vadd.s32 %v583, 17
        %v606 = vsel %vm600, %v604, %v598
        %v607 = vsel %vm601, %v605, %v599
        %vm608 = vcmp.gt.f32.partialorder %v557, %v602
        %vm609 = vcmp.gt.f32.partialorder %v559, %v603
        %v610 = vsel %vm608, %v557, %v602
        %v611 = vsel %vm609, %v559, %v603
        %v612 = vadd.s32 %v579, 256
        %v613 = vadd.s32 %v583, 256
        %v614 = vsel %vm608, %v612, %v606
        %v615 = vsel %vm609, %v613, %v607
        %vm616 = vcmp.gt.f32.partialorder %v561, %v610
        %vm617 = vcmp.gt.f32.partialorder %v563, %v611
        %v618 = vsel %vm616, %v561, %v610
        %v619 = vsel %vm617, %v563, %v611
        %v620 = vadd.s32 %v579, 257
        %v621 = vadd.s32 %v583, 257
        %v622 = vsel %vm616, %v620, %v614
        %v623 = vsel %vm617, %v621, %v615
        %vm624 = vcmp.gt.f32.partialorder %v567, %v618
        %vm625 = vcmp.gt.f32.partialorder %v569, %v619
        %v626 = vsel %vm624, %v567, %v618
        %v627 = vsel %vm625, %v569, %v619
        %v628 = vadd.s32 %v579, 272
        %v629 = vadd.s32 %v583, 272
        %v630 = vsel %vm624, %v628, %v622
        %v631 = vsel %vm625, %v629, %v623
        %vm632 = vcmp.gt.f32.partialorder %v571, %v626
        %vm633 = vcmp.gt.f32.partialorder %v573, %v627
        %v634 = vsel %vm632, %v571, %v626
        %v635 = vsel %vm633, %v573, %v627
        %v636 = vadd.s32 %v579, 273
        %v637 = vadd.s32 %v583, 273
        %v638 = vsel %vm632, %v636, %v630
        %v639 = vsel %vm633, %v637, %v631
        %640 = vst [vmem:[%s328] sm:$0xff] %v634
        %641 = vst [vmem:[%s328 + $0x8] sm:$0xff] %v635
        %642 = vst [vmem:[%s334] sm:$0xff] %v638
        %643 = vst [vmem:[%s334 + $0x8] sm:$0xff] %v639
        %s644 = smul.u32 2, %s16
        %p645 = scmp.lt.s32.totalorder %s644, 3
        %s646 = scalar_select %p645, %s644, 3
        %s647 = smul.addr %s646, 8
        %s648 = scalar_lea.vmem %s3, %s647
        %s649 = smul.u32 2, %s16
        %p650 = scmp.lt.s32.totalorder %s649, 3
        %s651 = scalar_select %p650, %s649, 3
        %s652 = smul.addr %s651, 8
        %s653 = scalar_lea.vmem %s4, %s652
        // Predicated region
        $region71: #{encoder3d_forward.2} parent=65 // pred_check
          %p654 = pneg %p107
        $region72: #{encoder3d_forward.2} parent=65 // pred_check_branch
          %656 = sbr.rel (%p654) target = $region74
        $region73: #{encoder3d_forward.2} parent=65 // pred_region
          %s657 = smul.u32 2, %s16
        $region74: #{encoder3d_forward.2} parent=65 // pred_fallthru
          _
        // Predicated region
        $region75: #{encoder3d_forward.2} parent=65 // pred_check
          %p658 = pneg %p133
        $region76: #{encoder3d_forward.2} parent=65 // pred_check_branch
          %660 = sbr.rel (%p658) target = $region78
        $region77: #{encoder3d_forward.2} parent=65 // pred_region
          %s661 = smul.u32 2, %s16
        $region78: #{encoder3d_forward.2} parent=65 // pred_fallthru
          _
      $region66: #{encoder3d_forward.2} parent=5 // pred_fallthru
        _
      %p662 = scmp.le.s32.totalorder 2, %s11
      // Predicated region
      $region79: #{encoder3d_forward.2} parent=5 // pred_check
        %p663 = pneg %p662
      $region80: #{encoder3d_forward.2} parent=5 // pred_check_branch
        %665 = sbr.rel (%p663) target = $region82
      $region81: #{encoder3d_forward.2} parent=5 // pred_region
        %s666 = ssub.s32 %s11, 2
        // Predicated region
        $region83: #{encoder3d_forward.2} parent=81 // pred_check
          %p667 = pneg %p113
        $region84: #{encoder3d_forward.2} parent=81 // pred_check_branch
          %669 = sbr.rel (%p667) target = $region86
        $region85: #{encoder3d_forward.2} parent=81 // pred_region
          %s670 = smul.u32 2, %s17
          %p671 = scmp.lt.s32.totalorder %s670, 3
          %s672 = scalar_select %p671, %s670, 3
          %s673 = smul.addr %s672, 8
          %s674 = scalar_lea.vmem %s3, %s673
        $region86: #{encoder3d_forward.2} parent=81 // pred_fallthru
          _
        // Predicated region
        $region87: #{encoder3d_forward.2} parent=81 // pred_check
          %p675 = pneg %p139
        $region88: #{encoder3d_forward.2} parent=81 // pred_check_branch
          %677 = sbr.rel (%p675) target = $region90
        $region89: #{encoder3d_forward.2} parent=81 // pred_region
          %s678 = smul.u32 2, %s17
          %p679 = scmp.lt.s32.totalorder %s678, 3
          %s680 = scalar_select %p679, %s678, 3
          %s681 = smul.addr %s680, 8
          %s682 = scalar_lea.vmem %s4, %s681
        $region90: #{encoder3d_forward.2} parent=81 // pred_fallthru
          _
      $region82: #{encoder3d_forward.2} parent=5 // pred_fallthru
        _
    $region6: #{encoder3d_forward.2} parent=1 // loop_footer
      %s15 = sadd.s32 1, %s11
    $region7: #{encoder3d_forward.2} parent=1 // loop_footer_branch
      %10 = sbr.rel target = $region3
    $region8: #{encoder3d_forward.2} parent=1 // loop_exit
      _

// kernel: encoder3d_forward.3
$region0: #{encoder3d_forward.3}
  #allocation0 [shape = 'u32[]', space=smem, size = 0x4, offset = 0x4, fixed_abs, tag = 'smem constant byte address 0x4 - core index']
  #allocation1 [shape = 'u32[144,128]{1,0:T(1,128)}', space=vmem, size = 0x12000, scoped, tag = 'internal scratch']
  %s0 = inlined_call_operand.vmem [shape: bf16[528,128], index: 0, kind: input, shape index: {}]
  %s1 = inlined_call_operand.vmem [shape: bf16[128,528], index: 1, kind: input, shape index: {}]
  %s2 = inlined_call_operand.vmem [shape: s32[1,128], index: 2, kind: input, shape index: {}]
  %s3 = inlined_call_operand.vmem [shape: f32[16,128], index: 3, kind: output, shape index: {0}]
  %s4 = inlined_call_operand.vmem [shape: s32[16,128], index: 4, kind: output, shape index: {1}]
  %5 = xla_tuple %s3, %s4
  %s6 = sld [smem:[#allocation0]]
  $region30: #{encoder3d_forward.3} parent=0
    _
  %s8 = ssub.s32 1, %s6
  %s9 = scalar_select 0, %s8, %s6
  // Predicated region
  $region2: #{encoder3d_forward.3} parent=0 // pred_check
    _
  $region3: #{encoder3d_forward.3} parent=0 // pred_check_branch
    %11 = sbr.rel (0) target = $region5
  $region4: #{encoder3d_forward.3} parent=0 // pred_region
    _
  $region5: #{encoder3d_forward.3} parent=0 // pred_fallthru
    _
  // Predicated region
  $region6: #{encoder3d_forward.3} parent=0 // pred_check
    _
  $region7: #{encoder3d_forward.3} parent=0 // pred_check_branch
    %13 = sbr.rel (0) target = $region9
  $region8: #{encoder3d_forward.3} parent=0 // pred_region
    _
  $region9: #{encoder3d_forward.3} parent=0 // pred_fallthru
    _
  // Predicated region
  $region10: #{encoder3d_forward.3} parent=0 // pred_check
    _
  $region11: #{encoder3d_forward.3} parent=0 // pred_check_branch
    %15 = sbr.rel (0) target = $region13
  $region12: #{encoder3d_forward.3} parent=0 // pred_region
    _
  $region13: #{encoder3d_forward.3} parent=0 // pred_fallthru
    _
  %v17 = vld [vmem:[%s1] sm:$0xff]
  %v18 = vld [vmem:[%s1 + $0x8] sm:$0xff]
  %v19 = vld [vmem:[%s1 + $0x10] sm:$0xf]
  %v20 = vld [vmem:[%s1 + $0x14] sm:$0xff]
  %v21 = vld [vmem:[%s1 + $0x1c] sm:$0xff]
  %v22 = vld [vmem:[%s1 + $0x24] sm:$0xf]
  %v23 = vld [vmem:[%s1 + $0x28] sm:$0xff]
  %v24 = vld [vmem:[%s1 + $0x30] sm:$0xff]
  %v25 = vld [vmem:[%s1 + $0x38] sm:$0xf]
  %v26 = vld [vmem:[%s1 + $0x3c] sm:$0xff]
  %v27 = vld [vmem:[%s1 + $0x44] sm:$0xff]
  %v28 = vld [vmem:[%s1 + $0x4c] sm:$0xf]
  %v29 = vld [vmem:[%s1 + $0x50] sm:$0xff]
  %v30 = vld [vmem:[%s1 + $0x58] sm:$0xff]
  %v31 = vld [vmem:[%s1 + $0x60] sm:$0xf]
  %v32 = vld [vmem:[%s1 + $0x64] sm:$0xff]
  %v33 = vld [vmem:[%s1 + $0x6c] sm:$0xff]
  %v34 = vld [vmem:[%s1 + $0x74] sm:$0xf]
  %v35 = vld [vmem:[%s1 + $0x78] sm:$0xff]
  %v36 = vld [vmem:[%s1 + $0x80] sm:$0xff]
  %v37 = vld [vmem:[%s1 + $0x88] sm:$0xf]
  %v38 = vld [vmem:[%s1 + $0x8c] sm:$0xff]
  %v39 = vld [vmem:[%s1 + $0x94] sm:$0xff]
  %v40 = vld [vmem:[%s1 + $0x9c] sm:$0xf]
  %v41 = vld [vmem:[%s1 + $0xa0] sm:$0xff]
  %v42 = vld [vmem:[%s1 + $0xa8] sm:$0xff]
  %v43 = vld [vmem:[%s1 + $0xb0] sm:$0xf]
  %v44 = vld [vmem:[%s1 + $0xb4] sm:$0xff]
  %v45 = vld [vmem:[%s1 + $0xbc] sm:$0xff]
  %v46 = vld [vmem:[%s1 + $0xc4] sm:$0xf]
  %v47 = vld [vmem:[%s1 + $0xc8] sm:$0xff]
  %v48 = vld [vmem:[%s1 + $0xd0] sm:$0xff]
  %v49 = vld [vmem:[%s1 + $0xd8] sm:$0xf]
  %v50 = vld [vmem:[%s1 + $0xdc] sm:$0xff]
  %v51 = vld [vmem:[%s1 + $0xe4] sm:$0xff]
  %v52 = vld [vmem:[%s1 + $0xec] sm:$0xf]
  %v53 = vld [vmem:[%s1 + $0xf0] sm:$0xff]
  %v54 = vld [vmem:[%s1 + $0xf8] sm:$0xff]
  %v55 = vld [vmem:[%s1 + $0x100] sm:$0xf]
  %v56 = vld [vmem:[%s1 + $0x104] sm:$0xff]
  %v57 = vld [vmem:[%s1 + $0x10c] sm:$0xff]
  %v58 = vld [vmem:[%s1 + $0x114] sm:$0xf]
  %v59 = vld [vmem:[%s1 + $0x118] sm:$0xff]
  %v60 = vld [vmem:[%s1 + $0x120] sm:$0xff]
  %v61 = vld [vmem:[%s1 + $0x128] sm:$0xf]
  %v62 = vld [vmem:[%s1 + $0x12c] sm:$0xff]
  %v63 = vld [vmem:[%s1 + $0x134] sm:$0xff]
  %v64 = vld [vmem:[%s1 + $0x13c] sm:$0xf]
  %v65 = vld [vmem:[%s0] sm:$0xf]
  %v66 = vld [vmem:[%s0 + $0x4] sm:$0xf]
  %v67 = vld [vmem:[%s0 + $0x8] sm:$0xf]
  %v68 = vld [vmem:[%s0 + $0xc] sm:$0xf]
  %v69 = vld [vmem:[%s0 + $0x10] sm:$0xf]
  %v70 = vld [vmem:[%s0 + $0x14] sm:$0xf]
  %v71 = vld [vmem:[%s0 + $0x18] sm:$0xf]
  %v72 = vld [vmem:[%s0 + $0x1c] sm:$0xf]
  %v73 = vld [vmem:[%s0 + $0x20] sm:$0xf]
  %v74 = vld [vmem:[%s0 + $0x24] sm:$0xf]
  %v75 = vld [vmem:[%s0 + $0x28] sm:$0xf]
  %v76 = vld [vmem:[%s0 + $0x2c] sm:$0xf]
  %v77 = vld [vmem:[%s0 + $0x30] sm:$0xf]
  %v78 = vld [vmem:[%s0 + $0x34] sm:$0xf]
  %v79 = vld [vmem:[%s0 + $0x38] sm:$0xf]
  %v80 = vld [vmem:[%s0 + $0x3c] sm:$0xf]
  %v81 = vld [vmem:[%s0 + $0x40] sm:$0xf]
  %v82 = vld [vmem:[%s0 + $0x44] sm:$0xf]
  %v83 = vld [vmem:[%s0 + $0x48] sm:$0xf]
  %v84 = vld [vmem:[%s0 + $0x4c] sm:$0xf]
  %v85 = vld [vmem:[%s0 + $0x50] sm:$0xf]
  %v86 = vld [vmem:[%s0 + $0x54] sm:$0xf]
  %v87 = vld [vmem:[%s0 + $0x58] sm:$0xf]
  %v88 = vld [vmem:[%s0 + $0x5c] sm:$0xf]
  %v89 = vld [vmem:[%s0 + $0x60] sm:$0xf]
  %v90 = vld [vmem:[%s0 + $0x64] sm:$0xf]
  %v91 = vld [vmem:[%s0 + $0x68] sm:$0xf]
  %v92 = vld [vmem:[%s0 + $0x6c] sm:$0xf]
  %v93 = vld [vmem:[%s0 + $0x70] sm:$0xf]
  %v94 = vld [vmem:[%s0 + $0x74] sm:$0xf]
  %v95 = vld [vmem:[%s0 + $0x78] sm:$0xf]
  %v96 = vld [vmem:[%s0 + $0x7c] sm:$0xf]
  %v97 = vld [vmem:[%s0 + $0x80] sm:$0xf]
  %v98 = vld [vmem:[%s0 + $0x84] sm:$0xf]
  %v99 = vld [vmem:[%s0 + $0x88] sm:$0xf]
  %v100 = vld [vmem:[%s0 + $0x8c] sm:$0xf]
  %v101 = vld [vmem:[%s0 + $0x90] sm:$0xf]
  %v102 = vld [vmem:[%s0 + $0x94] sm:$0xf]
  %v103 = vld [vmem:[%s0 + $0x98] sm:$0xf]
  %v104 = vld [vmem:[%s0 + $0x9c] sm:$0xf]
  %v105 = vld [vmem:[%s0 + $0xa0] sm:$0xf]
  %v106 = vld [vmem:[%s0 + $0xa4] sm:$0xf]
  %v107 = vld [vmem:[%s0 + $0xa8] sm:$0xf]
  %v108 = vld [vmem:[%s0 + $0xac] sm:$0xf]
  %v109 = vld [vmem:[%s0 + $0xb0] sm:$0xf]
  %v110 = vld [vmem:[%s0 + $0xb4] sm:$0xf]
  %v111 = vld [vmem:[%s0 + $0xb8] sm:$0xf]
  %v112 = vld [vmem:[%s0 + $0xbc] sm:$0xf]
  %v113 = vld [vmem:[%s0 + $0xc0] sm:$0xf]
  %v114 = vld [vmem:[%s0 + $0xc4] sm:$0xf]
  %v115 = vld [vmem:[%s0 + $0xc8] sm:$0xf]
  %v116 = vld [vmem:[%s0 + $0xcc] sm:$0xf]
  %v117 = vld [vmem:[%s0 + $0xd0] sm:$0xf]
  %v118 = vld [vmem:[%s0 + $0xd4] sm:$0xf]
  %v119 = vld [vmem:[%s0 + $0xd8] sm:$0xf]
  %v120 = vld [vmem:[%s0 + $0xdc] sm:$0xf]
  %v121 = vld [vmem:[%s0 + $0xe0] sm:$0xf]
  %v122 = vld [vmem:[%s0 + $0xe4] sm:$0xf]
  %v123 = vld [vmem:[%s0 + $0xe8] sm:$0xf]
  %v124 = vld [vmem:[%s0 + $0xec] sm:$0xf]
  %v125 = vld [vmem:[%s0 + $0xf0] sm:$0xf]
  %v126 = vld [vmem:[%s0 + $0xf4] sm:$0xf]
  %v127 = vld [vmem:[%s0 + $0xf8] sm:$0xf]
  %v128 = vld [vmem:[%s0 + $0xfc] sm:$0xf]
  %v129 = vld [vmem:[%s0 + $0x100] sm:$0xf]
  %v130 = vld [vmem:[%s0 + $0x104] sm:$0xf]
  %v179 = vunpack.c.l.b16 %v17
  %v180 = vunpack.c.h.b16 %v17
  %v181 = vunpack.c.l.b16 %v18
  %v182 = vunpack.c.h.b16 %v18
  %v183 = vunpack.c.l.b16 %v19
  %v184 = vunpack.c.l.b16 %v20
  %v185 = vunpack.c.h.b16 %v20
  %v186 = vunpack.c.l.b16 %v21
  %v187 = vunpack.c.h.b16 %v21
  %v188 = vunpack.c.l.b16 %v22
  %v189 = vunpack.c.l.b16 %v23
  %v190 = vunpack.c.h.b16 %v23
  %v191 = vunpack.c.l.b16 %v24
  %v192 = vunpack.c.h.b16 %v24
  %v193 = vunpack.c.l.b16 %v25
  %v194 = vunpack.c.l.b16 %v26
  %v195 = vunpack.c.h.b16 %v26
  %v196 = vunpack.c.l.b16 %v27
  %v197 = vunpack.c.h.b16 %v27
  %v198 = vunpack.c.l.b16 %v28
  %v199 = vunpack.c.l.b16 %v29
  %v200 = vunpack.c.h.b16 %v29
  %v201 = vunpack.c.l.b16 %v30
  %v202 = vunpack.c.h.b16 %v30
  %v203 = vunpack.c.l.b16 %v31
  %v204 = vunpack.c.l.b16 %v32
  %v205 = vunpack.c.h.b16 %v32
  %v206 = vunpack.c.l.b16 %v33
  %v207 = vunpack.c.h.b16 %v33
  %v208 = vunpack.c.l.b16 %v34
  %v209 = vunpack.c.l.b16 %v35
  %v210 = vunpack.c.h.b16 %v35
  %v211 = vunpack.c.l.b16 %v36
  %v212 = vunpack.c.h.b16 %v36
  %v213 = vunpack.c.l.b16 %v37
  %v214 = vunpack.c.l.b16 %v38
  %v215 = vunpack.c.h.b16 %v38
  %v216 = vunpack.c.l.b16 %v39
  %v217 = vunpack.c.h.b16 %v39
  %v218 = vunpack.c.l.b16 %v40
  %v219 = vunpack.c.l.b16 %v41
  %v220 = vunpack.c.h.b16 %v41
  %v221 = vunpack.c.l.b16 %v42
  %v222 = vunpack.c.h.b16 %v42
  %v223 = vunpack.c.l.b16 %v43
  %v224 = vunpack.c.l.b16 %v44
  %v225 = vunpack.c.h.b16 %v44
  %v226 = vunpack.c.l.b16 %v45
  %v227 = vunpack.c.h.b16 %v45
  %v228 = vunpack.c.l.b16 %v46
  %v229 = vunpack.c.l.b16 %v47
  %v230 = vunpack.c.h.b16 %v47
  %v231 = vunpack.c.l.b16 %v48
  %v232 = vunpack.c.h.b16 %v48
  %v233 = vunpack.c.l.b16 %v49
  %v234 = vunpack.c.l.b16 %v50
  %v235 = vunpack.c.h.b16 %v50
  %v236 = vunpack.c.l.b16 %v51
  %v237 = vunpack.c.h.b16 %v51
  %v238 = vunpack.c.l.b16 %v52
  %v239 = vunpack.c.l.b16 %v53
  %v240 = vunpack.c.h.b16 %v53
  %v241 = vunpack.c.l.b16 %v54
  %v242 = vunpack.c.h.b16 %v54
  %v243 = vunpack.c.l.b16 %v55
  %v244 = vunpack.c.l.b16 %v56
  %v245 = vunpack.c.h.b16 %v56
  %v246 = vunpack.c.l.b16 %v57
  %v247 = vunpack.c.h.b16 %v57
  %v248 = vunpack.c.l.b16 %v58
  %v249 = vunpack.c.l.b16 %v59
  %v250 = vunpack.c.h.b16 %v59
  %v251 = vunpack.c.l.b16 %v60
  %v252 = vunpack.c.h.b16 %v60
  %v253 = vunpack.c.l.b16 %v61
  %v254 = vunpack.c.l.b16 %v62
  %v255 = vunpack.c.h.b16 %v62
  %v256 = vunpack.c.l.b16 %v63
  %v257 = vunpack.c.h.b16 %v63
  %v258 = vunpack.c.l.b16 %v64
  %v259 = vpack.c.b16 %v184, %v179
  %v260 = vpack.c.b16 %v185, %v180
  %v261 = vpack.c.b16 %v186, %v181
  %v262 = vpack.c.b16 %v187, %v182
  %v263 = vpack.c.b16 %v188, %v183
  %v264 = vpack.c.b16 %v194, %v189
  %v265 = vpack.c.b16 %v195, %v190
  %v266 = vpack.c.b16 %v196, %v191
  %v267 = vpack.c.b16 %v197, %v192
  %v268 = vpack.c.b16 %v198, %v193
  %v269 = vpack.c.b16 %v204, %v199
  %v270 = vpack.c.b16 %v205, %v200
  %v271 = vpack.c.b16 %v206, %v201
  %v272 = vpack.c.b16 %v207, %v202
  %v273 = vpack.c.b16 %v208, %v203
  %v274 = vpack.c.b16 %v214, %v209
  %v275 = vpack.c.b16 %v215, %v210
  %v276 = vpack.c.b16 %v216, %v211
  %v277 = vpack.c.b16 %v217, %v212
  %v278 = vpack.c.b16 %v218, %v213
  %v279 = vpack.c.b16 %v224, %v219
  %v280 = vpack.c.b16 %v225, %v220
  %v281 = vpack.c.b16 %v226, %v221
  %v282 = vpack.c.b16 %v227, %v222
  %v283 = vpack.c.b16 %v228, %v223
  %v284 = vpack.c.b16 %v234, %v229
  %v285 = vpack.c.b16 %v235, %v230
  %v286 = vpack.c.b16 %v236, %v231
  %v287 = vpack.c.b16 %v237, %v232
  %v288 = vpack.c.b16 %v238, %v233
  %v289 = vpack.c.b16 %v244, %v239
  %v290 = vpack.c.b16 %v245, %v240
  %v291 = vpack.c.b16 %v246, %v241
  %v292 = vpack.c.b16 %v247, %v242
  %v293 = vpack.c.b16 %v248, %v243
  %v294 = vpack.c.b16 %v254, %v249
  %v295 = vpack.c.b16 %v255, %v250
  %v296 = vpack.c.b16 %v256, %v251
  %v297 = vpack.c.b16 %v257, %v252
  %v298 = vpack.c.b16 %v258, %v253
  %v397 = vunpack.c.l.b16 %v65
  %v398 = vunpack.c.l.b16 %v66
  %v399 = vunpack.c.l.b16 %v67
  %v400 = vunpack.c.l.b16 %v68
  %v401 = vunpack.c.l.b16 %v69
  %v402 = vunpack.c.l.b16 %v70
  %v403 = vunpack.c.l.b16 %v71
  %v404 = vunpack.c.l.b16 %v72
  %v405 = vunpack.c.l.b16 %v73
  %v406 = vunpack.c.l.b16 %v74
  %v407 = vunpack.c.l.b16 %v75
  %v408 = vunpack.c.l.b16 %v76
  %v409 = vunpack.c.l.b16 %v77
  %v410 = vunpack.c.l.b16 %v78
  %v411 = vunpack.c.l.b16 %v79
  %v412 = vunpack.c.l.b16 %v80
  %v413 = vunpack.c.l.b16 %v81
  %v414 = vunpack.c.l.b16 %v82
  %v415 = vunpack.c.l.b16 %v83
  %v416 = vunpack.c.l.b16 %v84
  %v417 = vunpack.c.l.b16 %v85
  %v418 = vunpack.c.l.b16 %v86
  %v419 = vunpack.c.l.b16 %v87
  %v420 = vunpack.c.l.b16 %v88
  %v421 = vunpack.c.l.b16 %v89
  %v422 = vunpack.c.l.b16 %v90
  %v423 = vunpack.c.l.b16 %v91
  %v424 = vunpack.c.l.b16 %v92
  %v425 = vunpack.c.l.b16 %v93
  %v426 = vunpack.c.l.b16 %v94
  %v427 = vunpack.c.l.b16 %v95
  %v428 = vunpack.c.l.b16 %v96
  %v429 = vunpack.c.l.b16 %v97
  %v430 = vunpack.c.l.b16 %v98
  %v431 = vunpack.c.l.b16 %v99
  %v432 = vunpack.c.l.b16 %v100
  %v433 = vunpack.c.l.b16 %v101
  %v434 = vunpack.c.l.b16 %v102
  %v435 = vunpack.c.l.b16 %v103
  %v436 = vunpack.c.l.b16 %v104
  %v437 = vunpack.c.l.b16 %v105
  %v438 = vunpack.c.l.b16 %v106
  %v439 = vunpack.c.l.b16 %v107
  %v440 = vunpack.c.l.b16 %v108
  %v441 = vunpack.c.l.b16 %v109
  %v442 = vunpack.c.l.b16 %v110
  %v443 = vunpack.c.l.b16 %v111
  %v444 = vunpack.c.l.b16 %v112
  %v445 = vunpack.c.l.b16 %v113
  %v446 = vunpack.c.l.b16 %v114
  %v447 = vunpack.c.l.b16 %v115
  %v448 = vunpack.c.l.b16 %v116
  %v449 = vunpack.c.l.b16 %v117
  %v450 = vunpack.c.l.b16 %v118
  %v451 = vunpack.c.l.b16 %v119
  %v452 = vunpack.c.l.b16 %v120
  %v453 = vunpack.c.l.b16 %v121
  %v454 = vunpack.c.l.b16 %v122
  %v455 = vunpack.c.l.b16 %v123
  %v456 = vunpack.c.l.b16 %v124
  %v457 = vunpack.c.l.b16 %v125
  %v458 = vunpack.c.l.b16 %v126
  %v459 = vunpack.c.l.b16 %v127
  %v460 = vunpack.c.l.b16 %v128
  %v461 = vunpack.c.l.b16 %v129
  %v462 = vunpack.c.l.b16 %v130
  %v463 = vpack.c.b16 %v398, %v397
  %v464 = vpack.c.b16 %v400, %v399
  %v465 = vpack.c.b16 %v402, %v401
  %v466 = vpack.c.b16 %v404, %v403
  %v467 = vpack.c.b16 %v406, %v405
  %v468 = vpack.c.b16 %v408, %v407
  %v469 = vpack.c.b16 %v410, %v409
  %v470 = vpack.c.b16 %v412, %v411
  %v471 = vpack.c.b16 %v414, %v413
  %v472 = vpack.c.b16 %v416, %v415
  %v473 = vpack.c.b16 %v418, %v417
  %v474 = vpack.c.b16 %v420, %v419
  %v475 = vpack.c.b16 %v422, %v421
  %v476 = vpack.c.b16 %v424, %v423
  %v477 = vpack.c.b16 %v426, %v425
  %v478 = vpack.c.b16 %v428, %v427
  %v479 = vpack.c.b16 %v430, %v429
  %v480 = vpack.c.b16 %v432, %v431
  %v481 = vpack.c.b16 %v434, %v433
  %v482 = vpack.c.b16 %v436, %v435
  %v483 = vpack.c.b16 %v438, %v437
  %v484 = vpack.c.b16 %v440, %v439
  %v485 = vpack.c.b16 %v442, %v441
  %v486 = vpack.c.b16 %v444, %v443
  %v487 = vpack.c.b16 %v446, %v445
  %v488 = vpack.c.b16 %v448, %v447
  %v489 = vpack.c.b16 %v450, %v449
  %v490 = vpack.c.b16 %v452, %v451
  %v491 = vpack.c.b16 %v454, %v453
  %v492 = vpack.c.b16 %v456, %v455
  %v493 = vpack.c.b16 %v458, %v457
  %v494 = vpack.c.b16 %v460, %v459
  %v495 = vpack.c.b16 %v462, %v461
  %vm529 = vcmask 130048
  %v531 = vsel %vm529, %v263, 0
  %v534 = vsel %vm529, %v268, 0
  %v537 = vsel %vm529, %v273, 0
  %v540 = vsel %vm529, %v278, 0
  %v543 = vsel %vm529, %v283, 0
  %v546 = vsel %vm529, %v288, 0
  %v549 = vsel %vm529, %v293, 0
  %v552 = vsel %vm529, %v298, 0
  %554 = vmatprep.subr.bf16.mxu0 0
  %555 = vmatpush1.bf16.msra.mxu0 %v463
  %556 = vmatprep.subr.bf16.mxu0 0
  %557 = vmatpush1.bf16.msra.mxu0 %v464
  %558 = vmatprep.subr.bf16.mxu0 0
  %559 = vmatpush1.bf16.msra.mxu0 %v465
  %560 = vmatprep.subr.bf16.mxu0 0
  %561 = vmatpush1.bf16.msra.mxu0 %v466
  %562 = vmatprep.subr.bf16.mxu0 0
  %563 = vmatpush1.bf16.msra.mxu0 %v467
  %564 = vmatprep.subr.bf16.mxu0 0
  %565 = vmatpush1.bf16.msra.mxu0 %v468
  %566 = vmatprep.subr.bf16.mxu0 0
  %567 = vmatpush1.bf16.msra.mxu0 %v469
  %568 = vmatprep.subr.bf16.mxu0 0
  %569 = vmatpush1.bf16.msra.mxu0 %v470
  %570 = vmatprep.subr.bf16.mxu0 0
  %571 = vmatpush1.bf16.msra.mxu0 %v471
  %572 = vmatprep.subr.bf16.mxu0 0
  %573 = vmatpush1.bf16.msra.mxu0 %v472
  %574 = vmatprep.subr.bf16.mxu0 0
  %575 = vmatpush1.bf16.msra.mxu0 %v473
  %576 = vmatprep.subr.bf16.mxu0 0
  %577 = vmatpush1.bf16.msra.mxu0 %v474
  %578 = vmatprep.subr.bf16.mxu0 0
  %579 = vmatpush1.bf16.msra.mxu0 %v475
  %580 = vmatprep.subr.bf16.mxu0 0
  %581 = vmatpush1.bf16.msra.mxu0 %v476
  %582 = vmatprep.subr.bf16.mxu0 0
  %583 = vmatpush1.bf16.msra.mxu0 %v477
  %584 = vmatprep.subr.bf16.mxu0 0
  %585 = vmatpush1.bf16.msra.mxu0 %v478
  %586 = vmatprep.mubr.bf16.mxu0 %v260
  %587 = vmatmul.mubr.bf16.gmra.mrb[0].mxu0 %v259
  %v588 = vpop.f32.mrb[0].mxu0
  %v589 = vadd.f32 0.0, %v588
  %v590 = vpop.f32.mrb[0].mxu0
  %v591 = vpop.f32.mrb[0].mxu0
  %v592 = vadd.f32 0.0, %v591
  %v593 = vpop.f32.mrb[0].mxu0
  %594 = vmatprep.mubr.bf16.mxu0 %v265
  %595 = vmatmul.mubr.bf16.gmra.mrb[0].mxu0 %v264
  %v596 = vpop.f32.mrb[0].mxu0
  %v597 = vadd.f32 0.0, %v596
  %v598 = vpop.f32.mrb[0].mxu0
  %v599 = vpop.f32.mrb[0].mxu0
  %v600 = vadd.f32 0.0, %v599
  %v601 = vpop.f32.mrb[0].mxu0
  %602 = vmatprep.mubr.bf16.mxu0 %v270
  %603 = vmatmul.mubr.bf16.gmra.mrb[0].mxu0 %v269
  %v604 = vpop.f32.mrb[0].mxu0
  %v605 = vadd.f32 0.0, %v604
  %v606 = vpop.f32.mrb[0].mxu0
  %v607 = vpop.f32.mrb[0].mxu0
  %v608 = vadd.f32 0.0, %v607
  %v609 = vpop.f32.mrb[0].mxu0
  %610 = vmatprep.mubr.bf16.mxu0 %v275
  %611 = vmatmul.mubr.bf16.gmra.mrb[0].mxu0 %v274
  %v612 = vpop.f32.mrb[0].mxu0
  %v613 = vadd.f32 0.0, %v612
  %v614 = vpop.f32.mrb[0].mxu0
  %v615 = vpop.f32.mrb[0].mxu0
  %v616 = vadd.f32 0.0, %v615
  %v617 = vpop.f32.mrb[0].mxu0
  %618 = vmatprep.mubr.bf16.mxu0 %v280
  %619 = vmatmul.mubr.bf16.gmra.mrb[0].mxu0 %v279
  %v620 = vpop.f32.mrb[0].mxu0
  %v621 = vadd.f32 0.0, %v620
  %v622 = vpop.f32.mrb[0].mxu0
  %v623 = vpop.f32.mrb[0].mxu0
  %v624 = vadd.f32 0.0, %v623
  %v625 = vpop.f32.mrb[0].mxu0
  %626 = vmatprep.mubr.bf16.mxu0 %v285
  %627 = vmatmul.mubr.bf16.gmra.mrb[0].mxu0 %v284
  %v628 = vpop.f32.mrb[0].mxu0
  %v629 = vadd.f32 0.0, %v628
  %v630 = vpop.f32.mrb[0].mxu0
  %v631 = vpop.f32.mrb[0].mxu0
  %v632 = vadd.f32 0.0, %v631
  %v633 = vpop.f32.mrb[0].mxu0
  %634 = vmatprep.mubr.bf16.mxu0 %v290
  %635 = vmatmul.mubr.bf16.gmra.mrb[0].mxu0 %v289
  %v636 = vpop.f32.mrb[0].mxu0
  %v637 = vadd.f32 0.0, %v636
  %v638 = vpop.f32.mrb[0].mxu0
  %v639 = vpop.f32.mrb[0].mxu0
  %v640 = vadd.f32 0.0, %v639
  %v641 = vpop.f32.mrb[0].mxu0
  %642 = vmatprep.mubr.bf16.mxu0 %v295
  %643 = vmatmul.mubr.bf16.gmra.mrb[0].mxu0 %v294
  %v644 = vpop.f32.mrb[0].mxu0
  %v645 = vadd.f32 0.0, %v644
  %v646 = vpop.f32.mrb[0].mxu0
  %v647 = vpop.f32.mrb[0].mxu0
  %v648 = vadd.f32 0.0, %v647
  %v649 = vpop.f32.mrb[0].mxu0
  %650 = vdwg.mxu0
  %651 = vmatprep.subr.bf16.mxu0 0
  %652 = vmatpush1.bf16.msra.mxu0 %v479
  %653 = vmatprep.subr.bf16.mxu0 0
  %654 = vmatpush1.bf16.msra.mxu0 %v480
  %655 = vmatprep.subr.bf16.mxu0 0
  %656 = vmatpush1.bf16.msra.mxu0 %v481
  %657 = vmatprep.subr.bf16.mxu0 0
  %658 = vmatpush1.bf16.msra.mxu0 %v482
  %659 = vmatprep.subr.bf16.mxu0 0
  %660 = vmatpush1.bf16.msra.mxu0 %v483
  %661 = vmatprep.subr.bf16.mxu0 0
  %662 = vmatpush1.bf16.msra.mxu0 %v484
  %663 = vmatprep.subr.bf16.mxu0 0
  %664 = vmatpush1.bf16.msra.mxu0 %v485
  %665 = vmatprep.subr.bf16.mxu0 0
  %666 = vmatpush1.bf16.msra.mxu0 %v486
  %667 = vmatprep.subr.bf16.mxu0 0
  %668 = vmatpush1.bf16.msra.mxu0 %v487
  %669 = vmatprep.subr.bf16.mxu0 0
  %670 = vmatpush1.bf16.msra.mxu0 %v488
  %671 = vmatprep.subr.bf16.mxu0 0
  %672 = vmatpush1.bf16.msra.mxu0 %v489
  %673 = vmatprep.subr.bf16.mxu0 0
  %674 = vmatpush1.bf16.msra.mxu0 %v490
  %675 = vmatprep.subr.bf16.mxu0 0
  %676 = vmatpush1.bf16.msra.mxu0 %v491
  %677 = vmatprep.subr.bf16.mxu0 0
  %678 = vmatpush1.bf16.msra.mxu0 %v492
  %679 = vmatprep.subr.bf16.mxu0 0
  %680 = vmatpush1.bf16.msra.mxu0 %v493
  %681 = vmatprep.subr.bf16.mxu0 0
  %682 = vmatpush1.bf16.msra.mxu0 %v494
  %683 = vmatprep.mubr.bf16.mxu0 %v262
  %684 = vmatmul.mubr.bf16.gmra.mrb[0].mxu0 %v261
  %v685 = vpop.f32.mrb[0].mxu0
  %v686 = vadd.f32 %v589, %v685
  %v687 = vpop.f32.mrb[0].mxu0
  %v688 = vpop.f32.mrb[0].mxu0
  %v689 = vadd.f32 %v592, %v688
  %v690 = vpop.f32.mrb[0].mxu0
  %691 = vmatprep.mubr.bf16.mxu0 %v267
  %692 = vmatmul.mubr.bf16.gmra.mrb[0].mxu0 %v266
  %v693 = vpop.f32.mrb[0].mxu0
  %v694 = vadd.f32 %v597, %v693
  %v695 = vpop.f32.mrb[0].mxu0
  %v696 = vpop.f32.mrb[0].mxu0
  %v697 = vadd.f32 %v600, %v696
  %v698 = vpop.f32.mrb[0].mxu0
  %699 = vmatprep.mubr.bf16.mxu0 %v272
  %700 = vmatmul.mubr.bf16.gmra.mrb[0].mxu0 %v271
  %v701 = vpop.f32.mrb[0].mxu0
  %v702 = vadd.f32 %v605, %v701
  %v703 = vpop.f32.mrb[0].mxu0
  %v704 = vpop.f32.mrb[0].mxu0
  %v705 = vadd.f32 %v608, %v704
  %v706 = vpop.f32.mrb[0].mxu0
  %707 = vmatprep.mubr.bf16.mxu0 %v277
  %708 = vmatmul.mubr.bf16.gmra.mrb[0].mxu0 %v276
  %v709 = vpop.f32.mrb[0].mxu0
  %v710 = vadd.f32 %v613, %v709
  %v711 = vpop.f32.mrb[0].mxu0
  %v712 = vpop.f32.mrb[0].mxu0
  %v713 = vadd.f32 %v616, %v712
  %v714 = vpop.f32.mrb[0].mxu0
  %715 = vmatprep.mubr.bf16.mxu0 %v282
  %716 = vmatmul.mubr.bf16.gmra.mrb[0].mxu0 %v281
  %v717 = vpop.f32.mrb[0].mxu0
  %v718 = vadd.f32 %v621, %v717
  %v719 = vpop.f32.mrb[0].mxu0
  %v720 = vpop.f32.mrb[0].mxu0
  %v721 = vadd.f32 %v624, %v720
  %v722 = vpop.f32.mrb[0].mxu0
  %723 = vmatprep.mubr.bf16.mxu0 %v287
  %724 = vmatmul.mubr.bf16.gmra.mrb[0].mxu0 %v286
  %v725 = vpop.f32.mrb[0].mxu0
  %v726 = vadd.f32 %v629, %v725
  %v727 = vpop.f32.mrb[0].mxu0
  %v728 = vpop.f32.mrb[0].mxu0
  %v729 = vadd.f32 %v632, %v728
  %v730 = vpop.f32.mrb[0].mxu0
  %731 = vmatprep.mubr.bf16.mxu0 %v292
  %732 = vmatmul.mubr.bf16.gmra.mrb[0].mxu0 %v291
  %v733 = vpop.f32.mrb[0].mxu0
  %v734 = vadd.f32 %v637, %v733
  %v735 = vpop.f32.mrb[0].mxu0
  %v736 = vpop.f32.mrb[0].mxu0
  %v737 = vadd.f32 %v640, %v736
  %v738 = vpop.f32.mrb[0].mxu0
  %739 = vmatprep.mubr.bf16.mxu0 %v297
  %740 = vmatmul.mubr.bf16.gmra.mrb[0].mxu0 %v296
  %v741 = vpop.f32.mrb[0].mxu0
  %v742 = vadd.f32 %v645, %v741
  %v743 = vpop.f32.mrb[0].mxu0
  %v744 = vpop.f32.mrb[0].mxu0
  %v745 = vadd.f32 %v648, %v744
  %v746 = vpop.f32.mrb[0].mxu0
  %747 = vdwg.mxu0
  %748 = vmatprep.subr.bf16.mxu0 0
  %749 = vmatpush1.bf16.msra.mxu0 %v495
  %750 = vmatprep.subr.bf16.mxu0 0
  %751 = vmatpush1.bf16.msra.mxu0 0
  %752 = vmatprep.subr.bf16.mxu0 0
  %753 = vmatpush1.bf16.msra.mxu0 0
  %754 = vmatprep.subr.bf16.mxu0 0
  %755 = vmatpush1.bf16.msra.mxu0 0
  %756 = vmatprep.subr.bf16.mxu0 0
  %757 = vmatpush1.bf16.msra.mxu0 0
  %758 = vmatprep.subr.bf16.mxu0 0
  %759 = vmatpush1.bf16.msra.mxu0 0
  %760 = vmatprep.subr.bf16.mxu0 0
  %761 = vmatpush1.bf16.msra.mxu0 0
  %762 = vmatprep.subr.bf16.mxu0 0
  %763 = vmatpush1.bf16.msra.mxu0 0
  %764 = vmatprep.subr.bf16.mxu0 0
  %765 = vmatpush1.bf16.msra.mxu0 0
  %766 = vmatprep.subr.bf16.mxu0 0
  %767 = vmatpush1.bf16.msra.mxu0 0
  %768 = vmatprep.subr.bf16.mxu0 0
  %769 = vmatpush1.bf16.msra.mxu0 0
  %770 = vmatprep.subr.bf16.mxu0 0
  %771 = vmatpush1.bf16.msra.mxu0 0
  %772 = vmatprep.subr.bf16.mxu0 0
  %773 = vmatpush1.bf16.msra.mxu0 0
  %774 = vmatprep.subr.bf16.mxu0 0
  %775 = vmatpush1.bf16.msra.mxu0 0
  %776 = vmatprep.subr.bf16.mxu0 0
  %777 = vmatpush1.bf16.msra.mxu0 0
  %778 = vmatprep.subr.bf16.mxu0 0
  %779 = vmatpush1.bf16.msra.mxu0 0
  %780 = vmatprep.mubr.bf16.mxu0 0
  %781 = vmatmul.mubr.bf16.gmra.mrb[0].mxu0 %v531
  %v782 = vpop.f32.mrb[0].mxu0
  %v783 = vadd.f32 %v686, %v782
  %v784 = vpop.f32.mrb[0].mxu0
  %v785 = vpop.f32.mrb[0].mxu0
  %v786 = vadd.f32 %v689, %v785
  %v787 = vpop.f32.mrb[0].mxu0
  %788 = vmatprep.mubr.bf16.mxu0 0
  %789 = vmatmul.mubr.bf16.gmra.mrb[0].mxu0 %v534
  %v790 = vpop.f32.mrb[0].mxu0
  %v791 = vadd.f32 %v694, %v790
  %v792 = vpop.f32.mrb[0].mxu0
  %v793 = vpop.f32.mrb[0].mxu0
  %v794 = vadd.f32 %v697, %v793
  %v795 = vpop.f32.mrb[0].mxu0
  %796 = vmatprep.mubr.bf16.mxu0 0
  %797 = vmatmul.mubr.bf16.gmra.mrb[0].mxu0 %v537
  %v798 = vpop.f32.mrb[0].mxu0
  %v799 = vadd.f32 %v702, %v798
  %v800 = vpop.f32.mrb[0].mxu0
  %v801 = vpop.f32.mrb[0].mxu0
  %v802 = vadd.f32 %v705, %v801
  %v803 = vpop.f32.mrb[0].mxu0
  %804 = vmatprep.mubr.bf16.mxu0 0
  %805 = vmatmul.mubr.bf16.gmra.mrb[0].mxu0 %v540
  %v806 = vpop.f32.mrb[0].mxu0
  %v807 = vadd.f32 %v710, %v806
  %v808 = vpop.f32.mrb[0].mxu0
  %v809 = vpop.f32.mrb[0].mxu0
  %v810 = vadd.f32 %v713, %v809
  %v811 = vpop.f32.mrb[0].mxu0
  %812 = vmatprep.mubr.bf16.mxu0 0
  %813 = vmatmul.mubr.bf16.gmra.mrb[0].mxu0 %v543
  %v814 = vpop.f32.mrb[0].mxu0
  %v815 = vadd.f32 %v718, %v814
  %v816 = vpop.f32.mrb[0].mxu0
  %v817 = vpop.f32.mrb[0].mxu0
  %v818 = vadd.f32 %v721, %v817
  %v819 = vpop.f32.mrb[0].mxu0
  %820 = vmatprep.mubr.bf16.mxu0 0
  %821 = vmatmul.mubr.bf16.gmra.mrb[0].mxu0 %v546
  %v822 = vpop.f32.mrb[0].mxu0
  %v823 = vadd.f32 %v726, %v822
  %v824 = vpop.f32.mrb[0].mxu0
  %v825 = vpop.f32.mrb[0].mxu0
  %v826 = vadd.f32 %v729, %v825
  %v827 = vpop.f32.mrb[0].mxu0
  %828 = vmatprep.mubr.bf16.mxu0 0
  %829 = vmatmul.mubr.bf16.gmra.mrb[0].mxu0 %v549
  %v830 = vpop.f32.mrb[0].mxu0
  %v831 = vadd.f32 %v734, %v830
  %v832 = vpop.f32.mrb[0].mxu0
  %v833 = vpop.f32.mrb[0].mxu0
  %v834 = vadd.f32 %v737, %v833
  %v835 = vpop.f32.mrb[0].mxu0
  %836 = vmatprep.mubr.bf16.mxu0 0
  %837 = vmatmul.mubr.bf16.gmra.mrb[0].mxu0 %v552
  %v838 = vpop.f32.mrb[0].mxu0
  %v839 = vadd.f32 %v742, %v838
  %v840 = vpop.f32.mrb[0].mxu0
  %v841 = vpop.f32.mrb[0].mxu0
  %v842 = vadd.f32 %v745, %v841
  %v843 = vpop.f32.mrb[0].mxu0
  %844 = vdwg.mxu0
  %v845 = vld [vmem:[%s2] sm:$0x1]
  %v846 = vlaneseq
  %v847 = vshrl.u32 %v846, 7
  %v848 = vsub.s32 0, %v847
  %v849 = vrot.slane %v845, %v848
  %vm850 = vcmp.gt.f32.partialorder %v791, %v783
  %vm851 = vcmp.gt.f32.partialorder %v794, %v786
  %v852 = vsel %vm850, %v791, %v783
  %v853 = vsel %vm851, %v794, %v786
  %v854 = vadd.s32 %v849, 1
  %v855 = vsel %vm850, %v854, %v849
  %v856 = vsel %vm851, %v854, %v849
  %vm857 = vcmp.gt.f32.partialorder %v799, %v852
  %vm858 = vcmp.gt.f32.partialorder %v802, %v853
  %v859 = vsel %vm857, %v799, %v852
  %v860 = vsel %vm858, %v802, %v853
  %v861 = vadd.s32 %v849, 6
  %v862 = vsel %vm857, %v861, %v855
  %v863 = vsel %vm858, %v861, %v856
  %vm864 = vcmp.gt.f32.partialorder %v807, %v859
  %vm865 = vcmp.gt.f32.partialorder %v810, %v860
  %v866 = vsel %vm864, %v807, %v859
  %v867 = vsel %vm865, %v810, %v860
  %v868 = vadd.s32 %v849, 7
  %v869 = vsel %vm864, %v868, %v862
  %v870 = vsel %vm865, %v868, %v863
  %vm871 = vcmp.gt.f32.partialorder %v815, %v866
  %vm872 = vcmp.gt.f32.partialorder %v818, %v867
  %v873 = vsel %vm871, %v815, %v866
  %v874 = vsel %vm872, %v818, %v867
  %v875 = vadd.s32 %v849, 36
  %v876 = vsel %vm871, %v875, %v869
  %v877 = vsel %vm872, %v875, %v870
  %vm878 = vcmp.gt.f32.partialorder %v823, %v873
  %vm879 = vcmp.gt.f32.partialorder %v826, %v874
  %v880 = vsel %vm878, %v823, %v873
  %v881 = vsel %vm879, %v826, %v874
  %v882 = vadd.s32 %v849, 37
  %v883 = vsel %vm878, %v882, %v876
  %v884 = vsel %vm879, %v882, %v877
  %vm885 = vcmp.gt.f32.partialorder %v831, %v880
  %vm886 = vcmp.gt.f32.partialorder %v834, %v881
  %v887 = vsel %vm885, %v831, %v880
  %v888 = vsel %vm886, %v834, %v881
  %v889 = vadd.s32 %v849, 42
  %v890 = vsel %vm885, %v889, %v883
  %v891 = vsel %vm886, %v889, %v884
  %vm892 = vcmp.gt.f32.partialorder %v839, %v887
  %vm893 = vcmp.gt.f32.partialorder %v842, %v888
  %v894 = vsel %vm892, %v839, %v887
  %v895 = vsel %vm893, %v842, %v888
  %v896 = vadd.s32 %v849, 43
  %v897 = vsel %vm892, %v896, %v890
  %v898 = vsel %vm893, %v896, %v891
  %899 = vst [vmem:[%s3] sm:$0xff] %v894
  %900 = vst [vmem:[%s3 + $0x8] sm:$0xff] %v895
  %901 = vst [vmem:[%s4] sm:$0xff] %v897
  %902 = vst [vmem:[%s4 + $0x8] sm:$0xff] %v898
  // Predicated region
  $region14: #{encoder3d_forward.3} parent=0 // pred_check
    _
  $region15: #{encoder3d_forward.3} parent=0 // pred_check_branch
    %904 = sbr.rel (0) target = $region17
  $region16: #{encoder3d_forward.3} parent=0 // pred_region
    _
  $region17: #{encoder3d_forward.3} parent=0 // pred_fallthru
    _
  // Predicated region
  $region18: #{encoder3d_forward.3} parent=0 // pred_check
    _
  $region19: #{encoder3d_forward.3} parent=0 // pred_check_branch
    %906 = sbr.rel (0) target = $region21
  $region20: #{encoder3d_forward.3} parent=0 // pred_region
    _
  $region21: #{encoder3d_forward.3} parent=0 // pred_fallthru
    _
  // Predicated region
  $region22: #{encoder3d_forward.3} parent=0 // pred_check
    _
  $region23: #{encoder3d_forward.3} parent=0 // pred_check_branch
    %908 = sbr.rel (0) target = $region25
  $region24: #{encoder3d_forward.3} parent=0 // pred_region
    _
  $region25: #{encoder3d_forward.3} parent=0 // pred_fallthru
    _
  // Predicated region
  $region26: #{encoder3d_forward.3} parent=0 // pred_check
    _
  $region27: #{encoder3d_forward.3} parent=0 // pred_check_branch
    %910 = sbr.rel (0) target = $region29
  $region28: #{encoder3d_forward.3} parent=0 // pred_region
    _
  $region29: #{encoder3d_forward.3} parent=0 // pred_fallthru
    _

</llo_original>
